<compile_context>
chip_gen: v7x
topology: tpu7x:2x2x1
jax: 0.10.0
libtpu: 0.0.40
codegen_flags: <defaults>
</compile_context>

<pallas_src>
import functools

import jax
import jax.numpy as jnp
from jax import lax
from jax.experimental import pallas as pl
from jax.experimental.pallas import tpu as pltpu


# --------------------------------------------------------------------------------------
# Fused kernel: one grid step = (batch block b, layer l); activations stay in VMEM scratch.
# --------------------------------------------------------------------------------------
def _fused_layers_kernel(num_heads,
                         x_ref,
                         ln1_g_ref, ln1_b_ref,
                         wqkv_ref, wproj_ref, bproj_ref,
                         ln2_g_ref, ln2_b_ref,
                         w1_ref, b1_ref, w2_ref, b2_ref,
                         o_ref,
                         act_ref):
    layer = pl.program_id(1)
    num_layers = pl.num_programs(1)

    Bblk, N, C = x_ref.shape
    R = Bblk * N                     # rows processed per grid step (batch folded into rows)
    H = num_heads
    D = C // H
    scale = D ** -0.5
    eps = 1e-5                       # PyTorch LayerNorm default

    # Load this batch-block into the resident activation scratch at the first layer.
    @pl.when(layer == 0)
    def _init():
        act_ref[...] = x_ref[...].reshape(R, C).astype(jnp.float32)

    x = act_ref[...]                 # (R, C) float32 running activations

    def layer_norm(z, g, b):         # g, b: (1, C) f32
        mu = jnp.mean(z, axis=-1, keepdims=True)
        var = jnp.mean((z - mu) ** 2, axis=-1, keepdims=True)
        return (z - mu) * lax.rsqrt(var + eps) * g + b

    # ---------------- LN1 + multi-head self-attention (bias=False on q/kv) ----------------
    xn = layer_norm(x, ln1_g_ref[0], ln1_b_ref[0])
    # One lane-dense fused QKV matmul: (R, C) @ (C, 3C) -> (R, 3C), f32 accumulation.
    qkv = jnp.dot(xn.astype(jnp.bfloat16), wqkv_ref[0],
                  preferred_element_type=jnp.float32)
    q = (qkv[:, :C] * scale).astype(jnp.bfloat16)       # fold 1/sqrt(D) into q
    k = qkv[:, C:2 * C].astype(jnp.bfloat16)
    v = qkv[:, 2 * C:].astype(jnp.bfloat16)

    def to_heads(t):                 # (R, C) -> (H*Bblk, N, D), batch order (h, b)
        hs = jnp.stack([t[:, h * D:(h + 1) * D] for h in range(H)], axis=0)   # (H, R, D)
        return hs.reshape(H * Bblk, N, D)

    qh, kh, vh = to_heads(q), to_heads(k), to_heads(v)

    s = jnp.einsum('xnd,xmd->xnm', qh, kh,
                   preferred_element_type=jnp.float32)   # (H*Bblk, N, N) scores
    s = s - jnp.max(s, axis=-1, keepdims=True)
    p = jnp.exp(s)
    denom = jnp.sum(p, axis=-1, keepdims=True)
    p = p * pl.reciprocal(denom, approx=True)            # EUP reciprocal, frees VALU slots

    out_h = jnp.einsum('xnm,xmd->xnd', p.astype(jnp.bfloat16), vh,
                       preferred_element_type=jnp.float32)   # (H*Bblk, N, D)

    # Merge heads back to a lane-dense (R, C) slab and project with ONE K=128 matmul.
    out_h = out_h.astype(jnp.bfloat16).reshape(H, R, D)
    o2 = jnp.concatenate([out_h[h] for h in range(H)], axis=-1)          # (R, C) bf16
    att = jnp.dot(o2, wproj_ref[0],
                  preferred_element_type=jnp.float32) + bproj_ref[0]
    x = x + att                                           # residual 1

    # ---------------- LN2 + MLP (Linear -> ReLU -> Linear), mlp_ratio=2.0 ----------------
    xn2 = layer_norm(x, ln2_g_ref[0], ln2_b_ref[0])
    hid = jnp.dot(xn2.astype(jnp.bfloat16), w1_ref[0],
                  preferred_element_type=jnp.float32) + b1_ref[0]
    hid = jnp.maximum(hid, 0.0)                           # F.relu
    mlp = jnp.dot(hid.astype(jnp.bfloat16), w2_ref[0],
                  preferred_element_type=jnp.float32) + b2_ref[0]
    y = x + mlp                                           # residual 2

    act_ref[...] = y                                      # resident for the next layer

    # NOTE: the output block index depends only on the batch axis; the layer axis must stay
    # the inner ("arbitrary") grid axis for this writeback / act_ref residency to be valid.
    @pl.when(layer == num_layers - 1)
    def _write():
        o_ref[...] = y.reshape(Bblk, N, C).astype(o_ref.dtype)


_PARAM_ORDER = ('ln1_g', 'ln1_b', 'wqkv', 'wproj', 'bproj',
                'ln2_g', 'ln2_b', 'w1', 'b1', 'w2', 'b2')


def _layer_index_map(ndim):
    trailing = (0,) * (ndim - 1)

    def idx(b, l):
        return (l,) + trailing
    return idx


def _nbytes(shape, dtype):
    n = 1
    for d in shape:
        n *= int(d)
    return n * jnp.dtype(dtype).itemsize


def transformer_pallas(x, packed, num_heads, max_block_rows=512):
    """x: (B, N, C) float32.  packed: dict of layer-stacked weights (see pack_params)."""
    B, N, C = x.shape
    assert C % num_heads == 0
    L = packed['ln1_g'].shape[0]
    weights = [packed[k] for k in _PARAM_ORDER]

    # Fold as many batch elements as possible into one grid step (row packing: better
    # sublane/MXU-row fill, fewer grid steps, weights fetched once per layer per block).
    Bblk = 1
    for b in range(1, B + 1):
        if B % b == 0 and b * N <= max_block_rows:
            Bblk = b
    nb = B // Bblk

    in_specs = [pl.BlockSpec((Bblk, N, C), lambda b, l: (b, 0, 0))]
    for w in weights:
        blk = (1,) + tuple(w.shape[1:])
        in_specs.append(pl.BlockSpec(blk, _layer_index_map(w.ndim)))
    out_specs = pl.BlockSpec((Bblk, N, C), lambda b, l: (b, 0, 0))

    # VMEM budget: double-buffered io/weight blocks + resident activation scratch + a small
    # headroom for intermediates; capped at (vmem capacity - 16 MiB) so it is generation-aware
    # (never requests the full 64 MiB of a v7x TensorCore).
    io_bytes = _nbytes((Bblk, N, C), x.dtype)
    w_bytes = sum(_nbytes((1,) + tuple(w.shape[1:]), w.dtype) for w in weights)
    act_bytes = _nbytes((Bblk * N, C), jnp.float32)
    vmem_limit = 4 * io_bytes + 2 * w_bytes + act_bytes + (8 << 20)
    try:
        cap = int(pltpu.get_tpu_info().vmem_capacity_bytes)
    except Exception:
        cap = 64 << 20
    cap = max(cap - (16 << 20), 32 << 20)
    vmem_limit = int(min(max(vmem_limit, 32 << 20), cap))

    kernel = functools.partial(_fused_layers_kernel, num_heads)

    return pl.pallas_call(
        kernel,
        out_shape=jax.ShapeDtypeStruct((B, N, C), x.dtype),
        grid_spec=pltpu.PrefetchScalarGridSpec(
            num_scalar_prefetch=0,
            grid=(nb, L),                    # batch blocks: parallel / layers: arbitrary
            in_specs=in_specs,
            out_specs=out_specs,
            scratch_shapes=[pltpu.VMEM((Bblk * N, C), jnp.float32)],  # resident activations
        ),
        compiler_params=pltpu.CompilerParams(
            dimension_semantics=("parallel", "arbitrary"),
            vmem_limit_bytes=vmem_limit,
        ),
    )(x, *weights)


# --------------------------------------------------------------------------------------
# Parameter construction (host side)
# --------------------------------------------------------------------------------------
def init_layer_params(key, dim_self, mlp_ratio=2.0):
    """f32 params, pre-transposed to (in, out) so y = x @ W (+ b). Matmul weights are
    rounded to bf16-representable values so the bf16 kernel and the f32 reference share
    identical weight values."""
    h_dim = int(dim_self * mlp_ratio)
    ks = jax.random.split(key, 12)
    s = 0.05

    def mat(k, shape):
        w = s * jax.random.normal(k, shape, jnp.float32)
        return w.astype(jnp.bfloat16).astype(jnp.float32)

    return {
        'ln1_g': 1.0 + s * jax.random.normal(ks[0], (dim_self,), jnp.float32),
        'ln1_b': s * jax.random.normal(ks[1], (dim_self,), jnp.float32),
        'wq':    mat(ks[2], (dim_self, dim_self)),
        'wkv':   mat(ks[3], (dim_self, 2 * dim_self)),
        'wproj': mat(ks[4], (dim_self, dim_self)),
        'bproj': s * jax.random.normal(ks[5], (dim_self,), jnp.float32),
        'ln2_g': 1.0 + s * jax.random.normal(ks[6], (dim_self,), jnp.float32),
        'ln2_b': s * jax.random.normal(ks[7], (dim_self,), jnp.float32),
        'w1':    mat(ks[8], (dim_self, h_dim)),
        'b1':    s * jax.random.normal(ks[9], (h_dim,), jnp.float32),
        'w2':    mat(ks[10], (h_dim, dim_self)),
        'b2':    s * jax.random.normal(ks[11], (dim_self,), jnp.float32),
    }


def pack_params(layer_params):
    """Stack per-layer params over a leading layer axis.  q/k/v are fused into a single
    (L, C, 3C) bf16 weight (column order [Q | K | V], matching the PyTorch kv split)."""
    C = layer_params[0]['wq'].shape[0]

    def stack(key):
        return jnp.stack([p[key] for p in layer_params], axis=0)

    def vec(key):                                  # (L, dim) -> (L, 1, dim), keep f32
        return stack(key)[:, None, :]

    wq = stack('wq')                               # (L, C, C)
    wkv = stack('wkv')                             # (L, C, 2C)
    wk, wv = wkv[..., :C], wkv[..., C:]            # matches PyTorch reshape(...,2,H,D) split
    wqkv = jnp.concatenate([wq, wk, wv], axis=-1)  # (L, C, 3C)

    return {
        'ln1_g': vec('ln1_g'), 'ln1_b': vec('ln1_b'),
        'wqkv': wqkv.astype(jnp.bfloat16),
        'wproj': stack('wproj').astype(jnp.bfloat16),
        'bproj': vec('bproj'),
        'ln2_g': vec('ln2_g'), 'ln2_b': vec('ln2_b'),
        'w1': stack('w1').astype(jnp.bfloat16), 'b1': vec('b1'),
        'w2': stack('w2').astype(jnp.bfloat16), 'b2': vec('b2'),
    }


# --------------------------------------------------------------------------------------
# Pure-JAX reference (mirrors the PyTorch forward)
# --------------------------------------------------------------------------------------
def _layer_ref(x, p, num_heads):
    eps = 1e-5
    B, N, C = x.shape
    D = C // num_heads

    def ln(z, g, b):
        mu = z.mean(-1, keepdims=True)
        var = ((z - mu) ** 2).mean(-1, keepdims=True)
        return (z - mu) / jnp.sqrt(var + eps) * g + b

    xn = ln(x, p['ln1_g'], p['ln1_b'])
    q = xn @ p['wq']
    kv = xn @ p['wkv']
    k, v = kv[..., :C], kv[..., C:]
    qh = q.reshape(B, N, num_heads, D)
    kh = k.reshape(B, N, num_heads, D)
    vh = v.reshape(B, N, num_heads, D)
    att = jnp.einsum('bnhd,bmhd->bnmh', qh, kh) * D ** -0.5
    att = jax.nn.softmax(att, axis=2)
    out = jnp.einsum('bnmh,bmhd->bnhd', att, vh).reshape(B, N, C)
    out = out @ p['wproj'] + p['bproj']
    x = x + out
    xn2 = ln(x, p['ln2_g'], p['ln2_b'])
    h = jax.nn.relu(xn2 @ p['w1'] + p['b1'])
    return x + h @ p['w2'] + p['b2']


def transformer_ref(x, layer_params, num_heads):
    for p in layer_params:
        x = _layer_ref(x, p, num_heads)
    return x


if __name__ == "__main__":
    B, N, C = 2, 16, 128        # batch, sequence, dim_self (C lane-dense: multiple of 128)
    NUM_HEADS = 4
    NUM_LAYERS = 2
    MLP_RATIO = 2.0

    key = jax.random.PRNGKey(0)
    kx, kp = jax.random.split(key)
    x = jax.random.normal(kx, (B, N, C), jnp.float32)
    layer_params = [init_layer_params(jax.random.fold_in(kp, i), C, MLP_RATIO)
                    for i in range(NUM_LAYERS)]
    packed = pack_params(layer_params)

    out = transformer_pallas(x, packed, NUM_HEADS)
    out = jax.block_until_ready(out)

    ref = transformer_ref(x, layer_params, NUM_HEADS)
    assert out.shape == (B, N, C)
    max_err = jnp.max(jnp.abs(out - ref))
    # bf16 matmul inputs + approx reciprocal vs f32 reference -> loosened tolerance
    assert jnp.allclose(out, ref, atol=5e-2, rtol=5e-2), f"max abs err {max_err}"

    print("KERNEL_OK")
</pallas_src>

<mosaic_0001>
module attributes {stable_mosaic.version = 11 : i64} {
  func.func @_fused_layers_kernel(%arg0: i32, %arg1: i32, %arg2: memref<2x16x128xf32, #tpu.memory_space<vmem>>, %arg3: memref<1x1x128xf32, #tpu.memory_space<vmem>>, %arg4: memref<1x1x128xf32, #tpu.memory_space<vmem>>, %arg5: memref<1x128x384xbf16, #tpu.memory_space<vmem>>, %arg6: memref<1x128x128xbf16, #tpu.memory_space<vmem>>, %arg7: memref<1x1x128xf32, #tpu.memory_space<vmem>>, %arg8: memref<1x1x128xf32, #tpu.memory_space<vmem>>, %arg9: memref<1x1x128xf32, #tpu.memory_space<vmem>>, %arg10: memref<1x128x256xbf16, #tpu.memory_space<vmem>>, %arg11: memref<1x1x256xf32, #tpu.memory_space<vmem>>, %arg12: memref<1x256x128xbf16, #tpu.memory_space<vmem>>, %arg13: memref<1x1x128xf32, #tpu.memory_space<vmem>>, %arg14: memref<2x16x128xf32, #tpu.memory_space<vmem>>, %arg15: memref<32x128xf32, #tpu.memory_space<vmem>>) attributes {dimension_semantics = [#tpu.dimension_semantics<parallel>, #tpu.dimension_semantics<arbitrary>], iteration_bounds = array<i64: 1, 2>, scalar_prefetch = 0 : i64, scratch_operands = 1 : i64, tpu.core_type = #tpu.core_type<tc>, window_params = [{transform_indices = @transform_0, window_bounds = array<i64: 2, 16, 128>}, {transform_indices = @transform_1, window_bounds = array<i64: 1, 1, 128>}, {transform_indices = @transform_2, window_bounds = array<i64: 1, 1, 128>}, {transform_indices = @transform_3, window_bounds = array<i64: 1, 128, 384>}, {transform_indices = @transform_4, window_bounds = array<i64: 1, 128, 128>}, {transform_indices = @transform_5, window_bounds = array<i64: 1, 1, 128>}, {transform_indices = @transform_6, window_bounds = array<i64: 1, 1, 128>}, {transform_indices = @transform_7, window_bounds = array<i64: 1, 1, 128>}, {transform_indices = @transform_8, window_bounds = array<i64: 1, 128, 256>}, {transform_indices = @transform_9, window_bounds = array<i64: 1, 1, 256>}, {transform_indices = @transform_10, window_bounds = array<i64: 1, 256, 128>}, {transform_indices = @transform_11, window_bounds = array<i64: 1, 1, 128>}, {transform_indices = @transform_12, window_bounds = array<i64: 2, 16, 128>}]} {
    %c0_i32 = arith.constant 0 : i32
    %0 = arith.cmpi eq, %arg1, %c0_i32 : i32
    %1 = arith.extui %0 : i1 to i32
    %c0_i32_0 = arith.constant 0 : i32
    %2 = arith.cmpi ne, %1, %c0_i32_0 : i32
    scf.if %2 {
      %c0_57 = arith.constant 0 : index
      %c0_58 = arith.constant 0 : index
      %c0_59 = arith.constant 0 : index
      %153 = vector.load %arg2[%c0_57, %c0_58, %c0_59] : memref<2x16x128xf32, #tpu.memory_space<vmem>>, vector<2x16x128xf32>
      %154 = vector.shape_cast %153 : vector<2x16x128xf32> to vector<32x128xf32>
      %c0_60 = arith.constant 0 : index
      %c0_61 = arith.constant 0 : index
      %155 = vector.load %arg15[%c0_60, %c0_61] : memref<32x128xf32, #tpu.memory_space<vmem>>, vector<32x128xf32>
      tpu.vector_store %arg15[%c0_60, %c0_61], %154 {strides = array<i32>} : memref<32x128xf32, #tpu.memory_space<vmem>>, vector<32x128xf32>,
    } else {
    }
    %c0 = arith.constant 0 : index
    %c0_1 = arith.constant 0 : index
    %3 = vector.load %arg15[%c0, %c0_1] : memref<32x128xf32, #tpu.memory_space<vmem>>, vector<32x128xf32>
    %c0_2 = arith.constant 0 : index
    %c0_3 = arith.constant 0 : index
    %c0_4 = arith.constant 0 : index
    %4 = vector.load %arg3[%c0_2, %c0_3, %c0_4] : memref<1x1x128xf32, #tpu.memory_space<vmem>>, vector<1x1x128xf32>
    %5 = vector.shape_cast %4 : vector<1x1x128xf32> to vector<1x128xf32>
    %c0_5 = arith.constant 0 : index
    %c0_6 = arith.constant 0 : index
    %c0_7 = arith.constant 0 : index
    %6 = vector.load %arg4[%c0_5, %c0_6, %c0_7] : memref<1x1x128xf32, #tpu.memory_space<vmem>>, vector<1x1x128xf32>
    %7 = vector.shape_cast %6 : vector<1x1x128xf32> to vector<1x128xf32>
    %cst = arith.constant dense<0.000000e+00> : vector<32xf32>
    %8 = vector.multi_reduction <add>, %3, %cst [1] : vector<32x128xf32> to vector<32xf32>
    %9 = vector.shape_cast %8 : vector<32xf32> to vector<32x1xf32>
    %cst_8 = arith.constant 1.280000e+02 : f32
    %10 = vector.broadcast %cst_8 : f32 to vector<32x1xf32>
    %11 = arith.divf %9, %10 : vector<32x1xf32>
    %12 = vector.broadcast %11 : vector<32x1xf32> to vector<32x128xf32>
    %13 = arith.subf %3, %12 : vector<32x128xf32>
    %14 = arith.mulf %13, %13 : vector<32x128xf32>
    %cst_9 = arith.constant dense<0.000000e+00> : vector<32xf32>
    %15 = vector.multi_reduction <add>, %14, %cst_9 [1] : vector<32x128xf32> to vector<32xf32>
    %16 = vector.shape_cast %15 : vector<32xf32> to vector<32x1xf32>
    %cst_10 = arith.constant 1.280000e+02 : f32
    %17 = vector.broadcast %cst_10 : f32 to vector<32x1xf32>
    %18 = arith.divf %16, %17 : vector<32x1xf32>
    %19 = vector.broadcast %11 : vector<32x1xf32> to vector<32x128xf32>
    %20 = arith.subf %3, %19 : vector<32x128xf32>
    %cst_11 = arith.constant 9.99999974E-6 : f32
    %21 = vector.broadcast %cst_11 : f32 to vector<32x1xf32>
    %22 = arith.addf %18, %21 : vector<32x1xf32>
    %23 = math.rsqrt %22 : vector<32x1xf32>
    %24 = vector.broadcast %23 : vector<32x1xf32> to vector<32x128xf32>
    %25 = arith.mulf %20, %24 : vector<32x128xf32>
    %26 = vector.broadcast %5 : vector<1x128xf32> to vector<32x128xf32>
    %27 = arith.mulf %25, %26 : vector<32x128xf32>
    %28 = vector.broadcast %7 : vector<1x128xf32> to vector<32x128xf32>
    %29 = arith.addf %27, %28 : vector<32x128xf32>
    %30 = arith.truncf %29 : vector<32x128xf32> to vector<32x128xbf16>
    %c0_12 = arith.constant 0 : index
    %c0_13 = arith.constant 0 : index
    %c0_14 = arith.constant 0 : index
    %31 = vector.load %arg5[%c0_12, %c0_13, %c0_14] : memref<1x128x384xbf16, #tpu.memory_space<vmem>>, vector<1x128x384xbf16>
    %32 = vector.shape_cast %31 : vector<1x128x384xbf16> to vector<128x384xbf16>
    %cst_15 = arith.constant dense<0.000000e+00> : vector<32x384xf32>
    %33 = tpu.matmul %30, %32, %cst_15 {dimension_numbers = #tpu.dot_dimension_numbers<[1], [0], [0], [1], [0, 0, 1, 1], [], []>} : vector<32x128xbf16>, vector<128x384xbf16>, vector<32x384xf32> -> vector<32x384xf32>
    %34 = vector.extract_strided_slice %33 {offsets = [0, 0], sizes = [32, 128], strides = [1, 1]} : vector<32x384xf32> to vector<32x128xf32>
    %cst_16 = arith.constant 0.176776692 : f32
    %35 = vector.broadcast %cst_16 : f32 to vector<32x128xf32>
    %36 = arith.mulf %34, %35 : vector<32x128xf32>
    %37 = arith.truncf %36 : vector<32x128xf32> to vector<32x128xbf16>
    %38 = vector.extract_strided_slice %33 {offsets = [0, 128], sizes = [32, 128], strides = [1, 1]} : vector<32x384xf32> to vector<32x128xf32>
    %39 = arith.truncf %38 : vector<32x128xf32> to vector<32x128xbf16>
    %40 = vector.extract_strided_slice %33 {offsets = [0, 256], sizes = [32, 128], strides = [1, 1]} : vector<32x384xf32> to vector<32x128xf32>
    %41 = arith.truncf %40 : vector<32x128xf32> to vector<32x128xbf16>
    %42 = vector.extract_strided_slice %37 {offsets = [0, 0], sizes = [32, 32], strides = [1, 1]} : vector<32x128xbf16> to vector<32x32xbf16>
    %43 = vector.extract_strided_slice %37 {offsets = [0, 32], sizes = [32, 32], strides = [1, 1]} : vector<32x128xbf16> to vector<32x32xbf16>
    %44 = vector.extract_strided_slice %37 {offsets = [0, 64], sizes = [32, 32], strides = [1, 1]} : vector<32x128xbf16> to vector<32x32xbf16>
    %45 = vector.extract_strided_slice %37 {offsets = [0, 96], sizes = [32, 32], strides = [1, 1]} : vector<32x128xbf16> to vector<32x32xbf16>
    %46 = vector.shape_cast %42 : vector<32x32xbf16> to vector<1x32x32xbf16>
    %47 = vector.shape_cast %43 : vector<32x32xbf16> to vector<1x32x32xbf16>
    %48 = vector.shape_cast %44 : vector<32x32xbf16> to vector<1x32x32xbf16>
    %49 = vector.shape_cast %45 : vector<32x32xbf16> to vector<1x32x32xbf16>
    %50 = tpu.concatenate %46, %47, %48, %49 in 0 : vector<1x32x32xbf16>, vector<1x32x32xbf16>, vector<1x32x32xbf16>, vector<1x32x32xbf16> -> vector<4x32x32xbf16>
    %51 = vector.shape_cast %50 : vector<4x32x32xbf16> to vector<8x16x32xbf16>
    %52 = vector.extract_strided_slice %39 {offsets = [0, 0], sizes = [32, 32], strides = [1, 1]} : vector<32x128xbf16> to vector<32x32xbf16>
    %53 = vector.extract_strided_slice %39 {offsets = [0, 32], sizes = [32, 32], strides = [1, 1]} : vector<32x128xbf16> to vector<32x32xbf16>
    %54 = vector.extract_strided_slice %39 {offsets = [0, 64], sizes = [32, 32], strides = [1, 1]} : vector<32x128xbf16> to vector<32x32xbf16>
    %55 = vector.extract_strided_slice %39 {offsets = [0, 96], sizes = [32, 32], strides = [1, 1]} : vector<32x128xbf16> to vector<32x32xbf16>
    %56 = vector.shape_cast %52 : vector<32x32xbf16> to vector<1x32x32xbf16>
    %57 = vector.shape_cast %53 : vector<32x32xbf16> to vector<1x32x32xbf16>
    %58 = vector.shape_cast %54 : vector<32x32xbf16> to vector<1x32x32xbf16>
    %59 = vector.shape_cast %55 : vector<32x32xbf16> to vector<1x32x32xbf16>
    %60 = tpu.concatenate %56, %57, %58, %59 in 0 : vector<1x32x32xbf16>, vector<1x32x32xbf16>, vector<1x32x32xbf16>, vector<1x32x32xbf16> -> vector<4x32x32xbf16>
    %61 = vector.shape_cast %60 : vector<4x32x32xbf16> to vector<8x16x32xbf16>
    %62 = vector.extract_strided_slice %41 {offsets = [0, 0], sizes = [32, 32], strides = [1, 1]} : vector<32x128xbf16> to vector<32x32xbf16>
    %63 = vector.extract_strided_slice %41 {offsets = [0, 32], sizes = [32, 32], strides = [1, 1]} : vector<32x128xbf16> to vector<32x32xbf16>
    %64 = vector.extract_strided_slice %41 {offsets = [0, 64], sizes = [32, 32], strides = [1, 1]} : vector<32x128xbf16> to vector<32x32xbf16>
    %65 = vector.extract_strided_slice %41 {offsets = [0, 96], sizes = [32, 32], strides = [1, 1]} : vector<32x128xbf16> to vector<32x32xbf16>
    %66 = vector.shape_cast %62 : vector<32x32xbf16> to vector<1x32x32xbf16>
    %67 = vector.shape_cast %63 : vector<32x32xbf16> to vector<1x32x32xbf16>
    %68 = vector.shape_cast %64 : vector<32x32xbf16> to vector<1x32x32xbf16>
    %69 = vector.shape_cast %65 : vector<32x32xbf16> to vector<1x32x32xbf16>
    %70 = tpu.concatenate %66, %67, %68, %69 in 0 : vector<1x32x32xbf16>, vector<1x32x32xbf16>, vector<1x32x32xbf16>, vector<1x32x32xbf16> -> vector<4x32x32xbf16>
    %71 = vector.shape_cast %70 : vector<4x32x32xbf16> to vector<8x16x32xbf16>
    "tpu.trace_start"() <{level = 10 : i32, message = "xnd,xmd->xnm"}> : () -> ()
    %cst_17 = arith.constant dense<0.000000e+00> : vector<8x16x16xf32>
    %72 = tpu.matmul %51, %61, %cst_17 {dimension_numbers = #tpu.dot_dimension_numbers<[2], [2], [1], [1], [0, 0, 0, 1, 1, 1], [0], [0]>} : vector<8x16x32xbf16>, vector<8x16x32xbf16>, vector<8x16x16xf32> -> vector<8x16x16xf32>
    "tpu.trace_stop"() : () -> ()
    %cst_18 = arith.constant dense<0xFF800000> : vector<8x16xf32>
    %73 = vector.multi_reduction <maximumf>, %72, %cst_18 [2] : vector<8x16x16xf32> to vector<8x16xf32>
    %74 = vector.shape_cast %73 : vector<8x16xf32> to vector<8x16x1xf32>
    %75 = vector.broadcast %74 : vector<8x16x1xf32> to vector<8x16x16xf32>
    %76 = arith.subf %72, %75 : vector<8x16x16xf32>
    %77 = math.exp %76 : vector<8x16x16xf32>
    %cst_19 = arith.constant dense<0.000000e+00> : vector<8x16xf32>
    %78 = vector.multi_reduction <add>, %77, %cst_19 [2] : vector<8x16x16xf32> to vector<8x16xf32>
    %79 = vector.shape_cast %78 : vector<8x16xf32> to vector<8x16x1xf32>
    %80 = tpu.reciprocal %79 {approx = true} : vector<8x16x1xf32> -> vector<8x16x1xf32>
    %81 = vector.broadcast %80 : vector<8x16x1xf32> to vector<8x16x16xf32>
    %82 = arith.mulf %77, %81 : vector<8x16x16xf32>
    %83 = arith.truncf %82 : vector<8x16x16xf32> to vector<8x16x16xbf16>
    "tpu.trace_start"() <{level = 10 : i32, message = "xnm,xmd->xnd"}> : () -> ()
    %cst_20 = arith.constant dense<0.000000e+00> : vector<8x16x32xf32>
    %84 = tpu.matmul %83, %71, %cst_20 {dimension_numbers = #tpu.dot_dimension_numbers<[2], [1], [1], [2], [0, 0, 0, 1, 1, 2], [0], [0]>} : vector<8x16x16xbf16>, vector<8x16x32xbf16>, vector<8x16x32xf32> -> vector<8x16x32xf32>
    "tpu.trace_stop"() : () -> ()
    %85 = arith.truncf %84 : vector<8x16x32xf32> to vector<8x16x32xbf16>
    %86 = vector.shape_cast %85 : vector<8x16x32xbf16> to vector<4x32x32xbf16>
    %87 = vector.extract_strided_slice %86 {offsets = [0, 0, 0], sizes = [1, 32, 32], strides = [1, 1, 1]} : vector<4x32x32xbf16> to vector<1x32x32xbf16>
    %88 = vector.shape_cast %87 : vector<1x32x32xbf16> to vector<32x32xbf16>
    %89 = vector.extract_strided_slice %86 {offsets = [1, 0, 0], sizes = [1, 32, 32], strides = [1, 1, 1]} : vector<4x32x32xbf16> to vector<1x32x32xbf16>
    %90 = vector.shape_cast %89 : vector<1x32x32xbf16> to vector<32x32xbf16>
    %91 = vector.extract_strided_slice %86 {offsets = [2, 0, 0], sizes = [1, 32, 32], strides = [1, 1, 1]} : vector<4x32x32xbf16> to vector<1x32x32xbf16>
    %92 = vector.shape_cast %91 : vector<1x32x32xbf16> to vector<32x32xbf16>
    %93 = vector.extract_strided_slice %86 {offsets = [3, 0, 0], sizes = [1, 32, 32], strides = [1, 1, 1]} : vector<4x32x32xbf16> to vector<1x32x32xbf16>
    %94 = vector.shape_cast %93 : vector<1x32x32xbf16> to vector<32x32xbf16>
    %95 = tpu.concatenate %88, %90, %92, %94 in 1 : vector<32x32xbf16>, vector<32x32xbf16>, vector<32x32xbf16>, vector<32x32xbf16> -> vector<32x128xbf16>
    %c0_21 = arith.constant 0 : index
    %c0_22 = arith.constant 0 : index
    %c0_23 = arith.constant 0 : index
    %96 = vector.load %arg6[%c0_21, %c0_22, %c0_23] : memref<1x128x128xbf16, #tpu.memory_space<vmem>>, vector<1x128x128xbf16>
    %97 = vector.shape_cast %96 : vector<1x128x128xbf16> to vector<128x128xbf16>
    %cst_24 = arith.constant dense<0.000000e+00> : vector<32x128xf32>
    %98 = tpu.matmul %95, %97, %cst_24 {dimension_numbers = #tpu.dot_dimension_numbers<[1], [0], [0], [1], [0, 0, 1, 1], [], []>} : vector<32x128xbf16>, vector<128x128xbf16>, vector<32x128xf32> -> vector<32x128xf32>
    %c0_25 = arith.constant 0 : index
    %c0_26 = arith.constant 0 : index
    %c0_27 = arith.constant 0 : index
    %99 = vector.load %arg7[%c0_25, %c0_26, %c0_27] : memref<1x1x128xf32, #tpu.memory_space<vmem>>, vector<1x1x128xf32>
    %100 = vector.shape_cast %99 : vector<1x1x128xf32> to vector<1x128xf32>
    %101 = vector.broadcast %100 : vector<1x128xf32> to vector<32x128xf32>
    %102 = arith.addf %98, %101 : vector<32x128xf32>
    %103 = arith.addf %3, %102 : vector<32x128xf32>
    %c0_28 = arith.constant 0 : index
    %c0_29 = arith.constant 0 : index
    %c0_30 = arith.constant 0 : index
    %104 = vector.load %arg8[%c0_28, %c0_29, %c0_30] : memref<1x1x128xf32, #tpu.memory_space<vmem>>, vector<1x1x128xf32>
    %105 = vector.shape_cast %104 : vector<1x1x128xf32> to vector<1x128xf32>
    %c0_31 = arith.constant 0 : index
    %c0_32 = arith.constant 0 : index
    %c0_33 = arith.constant 0 : index
    %106 = vector.load %arg9[%c0_31, %c0_32, %c0_33] : memref<1x1x128xf32, #tpu.memory_space<vmem>>, vector<1x1x128xf32>
    %107 = vector.shape_cast %106 : vector<1x1x128xf32> to vector<1x128xf32>
    %cst_34 = arith.constant dense<0.000000e+00> : vector<32xf32>
    %108 = vector.multi_reduction <add>, %103, %cst_34 [1] : vector<32x128xf32> to vector<32xf32>
    %109 = vector.shape_cast %108 : vector<32xf32> to vector<32x1xf32>
    %cst_35 = arith.constant 1.280000e+02 : f32
    %110 = vector.broadcast %cst_35 : f32 to vector<32x1xf32>
    %111 = arith.divf %109, %110 : vector<32x1xf32>
    %112 = vector.broadcast %111 : vector<32x1xf32> to vector<32x128xf32>
    %113 = arith.subf %103, %112 : vector<32x128xf32>
    %114 = arith.mulf %113, %113 : vector<32x128xf32>
    %cst_36 = arith.constant dense<0.000000e+00> : vector<32xf32>
    %115 = vector.multi_reduction <add>, %114, %cst_36 [1] : vector<32x128xf32> to vector<32xf32>
    %116 = vector.shape_cast %115 : vector<32xf32> to vector<32x1xf32>
    %cst_37 = arith.constant 1.280000e+02 : f32
    %117 = vector.broadcast %cst_37 : f32 to vector<32x1xf32>
    %118 = arith.divf %116, %117 : vector<32x1xf32>
    %119 = vector.broadcast %111 : vector<32x1xf32> to vector<32x128xf32>
    %120 = arith.subf %103, %119 : vector<32x128xf32>
    %cst_38 = arith.constant 9.99999974E-6 : f32
    %121 = vector.broadcast %cst_38 : f32 to vector<32x1xf32>
    %122 = arith.addf %118, %121 : vector<32x1xf32>
    %123 = math.rsqrt %122 : vector<32x1xf32>
    %124 = vector.broadcast %123 : vector<32x1xf32> to vector<32x128xf32>
    %125 = arith.mulf %120, %124 : vector<32x128xf32>
    %126 = vector.broadcast %105 : vector<1x128xf32> to vector<32x128xf32>
    %127 = arith.mulf %125, %126 : vector<32x128xf32>
    %128 = vector.broadcast %107 : vector<1x128xf32> to vector<32x128xf32>
    %129 = arith.addf %127, %128 : vector<32x128xf32>
    %130 = arith.truncf %129 : vector<32x128xf32> to vector<32x128xbf16>
    %c0_39 = arith.constant 0 : index
    %c0_40 = arith.constant 0 : index
    %c0_41 = arith.constant 0 : index
    %131 = vector.load %arg10[%c0_39, %c0_40, %c0_41] : memref<1x128x256xbf16, #tpu.memory_space<vmem>>, vector<1x128x256xbf16>
    %132 = vector.shape_cast %131 : vector<1x128x256xbf16> to vector<128x256xbf16>
    %cst_42 = arith.constant dense<0.000000e+00> : vector<32x256xf32>
    %133 = tpu.matmul %130, %132, %cst_42 {dimension_numbers = #tpu.dot_dimension_numbers<[1], [0], [0], [1], [0, 0, 1, 1], [], []>} : vector<32x128xbf16>, vector<128x256xbf16>, vector<32x256xf32> -> vector<32x256xf32>
    %c0_43 = arith.constant 0 : index
    %c0_44 = arith.constant 0 : index
    %c0_45 = arith.constant 0 : index
    %134 = vector.load %arg11[%c0_43, %c0_44, %c0_45] : memref<1x1x256xf32, #tpu.memory_space<vmem>>, vector<1x1x256xf32>
    %135 = vector.shape_cast %134 : vector<1x1x256xf32> to vector<1x256xf32>
    %136 = vector.broadcast %135 : vector<1x256xf32> to vector<32x256xf32>
    %137 = arith.addf %133, %136 : vector<32x256xf32>
    %cst_46 = arith.constant 0.000000e+00 : f32
    %138 = vector.broadcast %cst_46 : f32 to vector<32x256xf32>
    %139 = arith.maximumf %137, %138 : vector<32x256xf32>
    %140 = arith.truncf %139 : vector<32x256xf32> to vector<32x256xbf16>
    %c0_47 = arith.constant 0 : index
    %c0_48 = arith.constant 0 : index
    %c0_49 = arith.constant 0 : index
    %141 = vector.load %arg12[%c0_47, %c0_48, %c0_49] : memref<1x256x128xbf16, #tpu.memory_space<vmem>>, vector<1x256x128xbf16>
    %142 = vector.shape_cast %141 : vector<1x256x128xbf16> to vector<256x128xbf16>
    %cst_50 = arith.constant dense<0.000000e+00> : vector<32x128xf32>
    %143 = tpu.matmul %140, %142, %cst_50 {dimension_numbers = #tpu.dot_dimension_numbers<[1], [0], [0], [1], [0, 0, 1, 1], [], []>} : vector<32x256xbf16>, vector<256x128xbf16>, vector<32x128xf32> -> vector<32x128xf32>
    %c0_51 = arith.constant 0 : index
    %c0_52 = arith.constant 0 : index
    %c0_53 = arith.constant 0 : index
    %144 = vector.load %arg13[%c0_51, %c0_52, %c0_53] : memref<1x1x128xf32, #tpu.memory_space<vmem>>, vector<1x1x128xf32>
    %145 = vector.shape_cast %144 : vector<1x1x128xf32> to vector<1x128xf32>
    %146 = vector.broadcast %145 : vector<1x128xf32> to vector<32x128xf32>
    %147 = arith.addf %143, %146 : vector<32x128xf32>
    %148 = arith.addf %103, %147 : vector<32x128xf32>
    %c0_54 = arith.constant 0 : index
    %c0_55 = arith.constant 0 : index
    %149 = vector.load %arg15[%c0_54, %c0_55] : memref<32x128xf32, #tpu.memory_space<vmem>>, vector<32x128xf32>
    tpu.vector_store %arg15[%c0_54, %c0_55], %148 {strides = array<i32>} : memref<32x128xf32, #tpu.memory_space<vmem>>, vector<32x128xf32>,
    %c1_i32 = arith.constant 1 : i32
    %150 = arith.cmpi eq, %arg1, %c1_i32 : i32
    %151 = arith.extui %150 : i1 to i32
    %c0_i32_56 = arith.constant 0 : i32
    %152 = arith.cmpi ne, %151, %c0_i32_56 : i32
    scf.if %152 {
      %153 = vector.shape_cast %148 : vector<32x128xf32> to vector<2x16x128xf32>
      %c0_57 = arith.constant 0 : index
      %c0_58 = arith.constant 0 : index
      %c0_59 = arith.constant 0 : index
      %154 = vector.load %arg14[%c0_57, %c0_58, %c0_59] : memref<2x16x128xf32, #tpu.memory_space<vmem>>, vector<2x16x128xf32>
      tpu.vector_store %arg14[%c0_57, %c0_58, %c0_59], %153 {strides = array<i32>} : memref<2x16x128xf32, #tpu.memory_space<vmem>>, vector<2x16x128xf32>,
    } else {
    }
    return
  }
  func.func @transform_0(%arg0: i32, %arg1: i32) -> (i32, i32, i32) {
    %c0_i32 = arith.constant 0 : i32
    %c0_i32_0 = arith.constant 0 : i32
    %c0_i32_1 = arith.constant 0 : i32
    return %arg0, %c0_i32, %c0_i32_0 : i32, i32, i32
  }
  func.func @transform_1(%arg0: i32, %arg1: i32) -> (i32, i32, i32) {
    %c0_i32 = arith.constant 0 : i32
    %c0_i32_0 = arith.constant 0 : i32
    %c0_i32_1 = arith.constant 0 : i32
    return %arg1, %c0_i32, %c0_i32_0 : i32, i32, i32
  }
  func.func @transform_2(%arg0: i32, %arg1: i32) -> (i32, i32, i32) {
    %c0_i32 = arith.constant 0 : i32
    %c0_i32_0 = arith.constant 0 : i32
    %c0_i32_1 = arith.constant 0 : i32
    return %arg1, %c0_i32, %c0_i32_0 : i32, i32, i32
  }
  func.func @transform_3(%arg0: i32, %arg1: i32) -> (i32, i32, i32) {
    %c0_i32 = arith.constant 0 : i32
    %c0_i32_0 = arith.constant 0 : i32
    %c0_i32_1 = arith.constant 0 : i32
    return %arg1, %c0_i32, %c0_i32_0 : i32, i32, i32
  }
  func.func @transform_4(%arg0: i32, %arg1: i32) -> (i32, i32, i32) {
    %c0_i32 = arith.constant 0 : i32
    %c0_i32_0 = arith.constant 0 : i32
    %c0_i32_1 = arith.constant 0 : i32
    return %arg1, %c0_i32, %c0_i32_0 : i32, i32, i32
  }
  func.func @transform_5(%arg0: i32, %arg1: i32) -> (i32, i32, i32) {
    %c0_i32 = arith.constant 0 : i32
    %c0_i32_0 = arith.constant 0 : i32
    %c0_i32_1 = arith.constant 0 : i32
    return %arg1, %c0_i32, %c0_i32_0 : i32, i32, i32
  }
  func.func @transform_6(%arg0: i32, %arg1: i32) -> (i32, i32, i32) {
    %c0_i32 = arith.constant 0 : i32
    %c0_i32_0 = arith.constant 0 : i32
    %c0_i32_1 = arith.constant 0 : i32
    return %arg1, %c0_i32, %c0_i32_0 : i32, i32, i32
  }
  func.func @transform_7(%arg0: i32, %arg1: i32) -> (i32, i32, i32) {
    %c0_i32 = arith.constant 0 : i32
    %c0_i32_0 = arith.constant 0 : i32
    %c0_i32_1 = arith.constant 0 : i32
    return %arg1, %c0_i32, %c0_i32_0 : i32, i32, i32
  }
  func.func @transform_8(%arg0: i32, %arg1: i32) -> (i32, i32, i32) {
    %c0_i32 = arith.constant 0 : i32
    %c0_i32_0 = arith.constant 0 : i32
    %c0_i32_1 = arith.constant 0 : i32
    return %arg1, %c0_i32, %c0_i32_0 : i32, i32, i32
  }
  func.func @transform_9(%arg0: i32, %arg1: i32) -> (i32, i32, i32) {
    %c0_i32 = arith.constant 0 : i32
    %c0_i32_0 = arith.constant 0 : i32
    %c0_i32_1 = arith.constant 0 : i32
    return %arg1, %c0_i32, %c0_i32_0 : i32, i32, i32
  }
  func.func @transform_10(%arg0: i32, %arg1: i32) -> (i32, i32, i32) {
    %c0_i32 = arith.constant 0 : i32
    %c0_i32_0 = arith.constant 0 : i32
    %c0_i32_1 = arith.constant 0 : i32
    return %arg1, %c0_i32, %c0_i32_0 : i32, i32, i32
  }
  func.func @transform_11(%arg0: i32, %arg1: i32) -> (i32, i32, i32) {
    %c0_i32 = arith.constant 0 : i32
    %c0_i32_0 = arith.constant 0 : i32
    %c0_i32_1 = arith.constant 0 : i32
    return %arg1, %c0_i32, %c0_i32_0 : i32, i32, i32
  }
  func.func @transform_12(%arg0: i32, %arg1: i32) -> (i32, i32, i32) {
    %c0_i32 = arith.constant 0 : i32
    %c0_i32_0 = arith.constant 0 : i32
    %c0_i32_1 = arith.constant 0 : i32
    return %arg0, %c0_i32, %c0_i32_0 : i32, i32, i32
  }
}

</mosaic_0001>

<llo_original>
// kernel: tpu_custom_call.1
$region0: #{tpu_custom_call.1}
  #allocation0 [shape = 'u32[]', space=smem, size = 0x4, offset = 0x4, fixed_abs, tag = 'smem constant byte address 0x4 - core index']
  #allocation1 [shape = 'u32[144,128]{1,0:T(1,128)}', space=vmem, size = 0x12000, scoped, tag = 'internal scratch']
  #allocation2 [shape = 'f32[32,128]{1,0:T(8,128)}', space=vmem, size = 0x4000, scoped, tag = 'scratch operand']
  %s0 = inlined_call_operand.hbm [shape: f32[2,16,128], index: 0, kind: input, shape index: {}]
  %s1 = inlined_call_operand.vmem [shape: f32[2,1,128], index: 1, kind: input, shape index: {}]
  %s2 = inlined_call_operand.hbm [shape: f32[2,1,128], index: 2, kind: input, shape index: {}]
  %s3 = inlined_call_operand.hbm [shape: bf16[2,128,384], index: 3, kind: input, shape index: {}]
  %s4 = inlined_call_operand.hbm [shape: bf16[2,128,128], index: 4, kind: input, shape index: {}]
  %s5 = inlined_call_operand.vmem [shape: f32[2,1,128], index: 5, kind: input, shape index: {}]
  %s6 = inlined_call_operand.vmem [shape: f32[2,1,128], index: 6, kind: input, shape index: {}]
  %s7 = inlined_call_operand.vmem [shape: f32[2,1,128], index: 7, kind: input, shape index: {}]
  %s8 = inlined_call_operand.hbm [shape: bf16[2,128,256], index: 8, kind: input, shape index: {}]
  %s9 = inlined_call_operand.vmem [shape: f32[2,1,256], index: 9, kind: input, shape index: {}]
  %s10 = inlined_call_operand.hbm [shape: bf16[2,256,128], index: 10, kind: input, shape index: {}]
  %s11 = inlined_call_operand.vmem [shape: f32[2,1,128], index: 11, kind: input, shape index: {}]
  %s12 = inlined_call_operand.hbm [shape: f32[2,16,128], index: 12, kind: output, shape index: {}]
  %s13 = sld [smem:[#allocation0]]
  $region113: #{tpu_custom_call.1} parent=0
    _
  %s15 = ssub.s32 1, %s13
  %s16 = scalar_select 0, %s15, %s13
  $region1: #{tpu_custom_call.1} parent=0
    #allocation3 [shape = 'u8[16384]{0}', space=vmem, size = 0x4000, scoped, tag = 'input window, operand 0, single buffered']
    #allocation4 [shape = 's32[2]{0}', space=sflag, size = 0x8, scoped, tag = 'scoped memory for tpu_custom_call.1']
    #allocation5 [shape = 's32[2]{0}', space=sflag, size = 0x8, scoped, tag = 'scoped memory for tpu_custom_call.1']
    #allocation6 [shape = 'u8[1024]{0}', space=vmem, size = 0x400, scoped, tag = 'input window, operand 2']
    #allocation7 [shape = 's32[2]{0}', space=sflag, size = 0x8, scoped, tag = 'scoped memory for tpu_custom_call.1']
    #allocation8 [shape = 'u8[196608]{0}', space=vmem, size = 0x30000, scoped, tag = 'input window, operand 3']
    #allocation9 [shape = 'u8[65536]{0}', space=vmem, size = 0x10000, scoped, tag = 'input window, operand 4']
    #allocation10 [shape = 's32[2]{0}', space=sflag, size = 0x8, scoped, tag = 'scoped memory for tpu_custom_call.1']
    #allocation11 [shape = 'u8[131072]{0}', space=vmem, size = 0x20000, scoped, tag = 'input window, operand 8']
    #allocation12 [shape = 'u8[131072]{0}', space=vmem, size = 0x20000, scoped, tag = 'input window, operand 10']
    #allocation13 [shape = 's32[2]{0}', space=sflag, size = 0x8, scoped, tag = 'scoped memory for tpu_custom_call.1']
    #allocation14 [shape = 'u8[16384]{0}', space=vmem, size = 0x4000, scoped, tag = 'output window, operand 0, single buffered']
    %17 = vsyncpa [#allocation4], 0
    %18 = vsyncpa [#allocation7], 0
    %s19 = scalar_lea.sflag [#allocation7], 1
    %20 = vsyncpa %s19, 0
    %21 = vsyncpa [#allocation10], 0
    %s22 = scalar_lea.sflag [#allocation10], 1
    %23 = vsyncpa %s22, 0
    %24 = vsyncpa [#allocation13], 0
    %s25 = scalar_lea.sflag [#allocation13], 1
    %26 = vsyncpa %s25, 0
    %27 = vsyncpa [#allocation5], 0
    loop: start=0, step=1, limit=4
    $region2: #{tpu_custom_call.1} parent=1 // loop_pre_header
      _
    $region3: #{tpu_custom_call.1} parent=1 // loop_header
      %s29 = sphi 0, %s33
      %p30 = scmp.ge.s32.totalorder %s29, 4
      %s36 = sphi 0, %s48
      %s37 = sphi 0, %s44
      %s38 = sphi 0, %s36
      %s39 = sphi 0, %s37
      %s40 = sphi 0, %s38
      %s41 = sphi 0, %s39
      %s51 = sphi 0, %s53
      %s54 = sphi 0, %s51
      %s55 = sphi 0, %s54
      %s71 = sphi 0, %s55
      %s77 = sphi 0, %s79
      %s80 = sphi 0, %s77
      %s81 = sphi 0, %s80
      %s97 = sphi 0, %s81
      %s103 = sphi 0, %s105
      %s106 = sphi 0, %s103
      %s107 = sphi 0, %s106
      %s123 = sphi 0, %s107
      %s129 = sphi 0, %s131
      %s132 = sphi 0, %s129
      %s133 = sphi 0, %s132
      %s149 = sphi 0, %s133
      %s155 = sphi 0, %s157
      %s158 = sphi 0, %s155
      %s159 = sphi 0, %s158
      %s175 = sphi 0, %s159
      %s181 = sphi 0, %s183
      %s184 = sphi 0, %s181
      %s185 = sphi 0, %s184
      %s201 = sphi 0, %s185
      %s207 = sphi 0, %s209
      %s210 = sphi 0, %s207
      %s211 = sphi 0, %s210
      %s227 = sphi 0, %s211
      %s233 = sphi 0, %s235
      %s236 = sphi 0, %s233
      %s237 = sphi 0, %s236
      %s253 = sphi 0, %s237
      %s259 = sphi 0, %s261
      %s262 = sphi 0, %s259
      %s263 = sphi 0, %s262
      %s279 = sphi 0, %s263
      %s285 = sphi 0, %s287
      %s288 = sphi 0, %s285
      %s289 = sphi 0, %s288
      %s305 = sphi 0, %s289
      %s311 = sphi 0, %s313
      %s314 = sphi 0, %s311
      %s315 = sphi 0, %s314
      %s331 = sphi 0, %s315
      %s337 = sphi 0, %s339
      %s340 = sphi 0, %s337
      %s341 = sphi 0, %s340
      %s357 = sphi 0, %s341
      %s363 = sphi 0, %s365
      %s366 = sphi 0, %s363
      %s367 = sphi 0, %s366
      %s383 = sphi 0, %s367
    $region4: #{tpu_custom_call.1} parent=1 // loop_header_branch
      %32 = sbr.rel (%p30) target = $region8
    $region5: #{tpu_custom_call.1} parent=1 // loop_body
      %s34 = ssub.s32 %s29, 1
      %s35 = ssub.s32 %s29, 2
      %s42 = sadd.s32 1, %s37
      %p43 = scmp.ge.s32.totalorder %s42, 2
      %s44 = scalar_select %p43, 0, %s42
      %s45 = sadd.s32 1, %s36
      %s46 = scalar_select %p43, %s45, %s36
      %p47 = scmp.ge.s32.totalorder %s46, 1
      %s48 = scalar_select %p47, 0, %s46
      %s49 = ssub.s32 %s36, %s48
      %p50 = scmp.eq.s32.totalorder %s49, 0
      %s52 = sadd.s32 %s51, 1
      %s53 = scalar_select %p50, %s51, %s52
      %p56 = pneg %p50
      %p57 = scmp.eq.s32.totalorder %s29, 1
      %p58 = por %p56, %p57
      %p59 = scmp.ne.s32.totalorder %s51, %s54
      %p60 = scmp.eq.s32.totalorder %s29, 0
      %p61 = por %p59, %p60
      %p62 = scmp.ne.s32.totalorder %s51, %s54
      %p63 = scmp.eq.s32.totalorder %s34, 1
      %p64 = por %p62, %p63
      %p65 = scmp.ne.s32.totalorder %s54, %s55
      %p66 = scmp.eq.s32.totalorder %s34, 0
      %p67 = por %p65, %p66
      %p68 = scmp.ne.s32.totalorder %s54, %s55
      %p69 = scmp.eq.s32.totalorder %s35, 1
      %p70 = por %p68, %p69
      %p72 = scmp.ne.s32.totalorder %s55, %s71
      %p73 = scmp.eq.s32.totalorder %s35, 0
      %p74 = por %p72, %p73
      %s75 = ssub.s32 %s37, %s44
      %p76 = scmp.eq.s32.totalorder %s75, 0
      %s78 = sadd.s32 %s77, 1
      %s79 = scalar_select %p76, %s77, %s78
      %p82 = pneg %p76
      %p83 = scmp.eq.s32.totalorder %s29, 1
      %p84 = por %p82, %p83
      %p85 = scmp.ne.s32.totalorder %s77, %s80
      %p86 = scmp.eq.s32.totalorder %s29, 0
      %p87 = por %p85, %p86
      %p88 = scmp.ne.s32.totalorder %s77, %s80
      %p89 = scmp.eq.s32.totalorder %s34, 1
      %p90 = por %p88, %p89
      %p91 = scmp.ne.s32.totalorder %s80, %s81
      %p92 = scmp.eq.s32.totalorder %s34, 0
      %p93 = por %p91, %p92
      %p94 = scmp.ne.s32.totalorder %s80, %s81
      %p95 = scmp.eq.s32.totalorder %s35, 1
      %p96 = por %p94, %p95
      %p98 = scmp.ne.s32.totalorder %s81, %s97
      %p99 = scmp.eq.s32.totalorder %s35, 0
      %p100 = por %p98, %p99
      %s101 = ssub.s32 %s37, %s44
      %p102 = scmp.eq.s32.totalorder %s101, 0
      %s104 = sadd.s32 %s103, 1
      %s105 = scalar_select %p102, %s103, %s104
      %p108 = pneg %p102
      %p109 = scmp.eq.s32.totalorder %s29, 1
      %p110 = por %p108, %p109
      %p111 = scmp.ne.s32.totalorder %s103, %s106
      %p112 = scmp.eq.s32.totalorder %s29, 0
      %p113 = por %p111, %p112
      %p114 = scmp.ne.s32.totalorder %s103, %s106
      %p115 = scmp.eq.s32.totalorder %s34, 1
      %p116 = por %p114, %p115
      %p117 = scmp.ne.s32.totalorder %s106, %s107
      %p118 = scmp.eq.s32.totalorder %s34, 0
      %p119 = por %p117, %p118
      %p120 = scmp.ne.s32.totalorder %s106, %s107
      %p121 = scmp.eq.s32.totalorder %s35, 1
      %p122 = por %p120, %p121
      %p124 = scmp.ne.s32.totalorder %s107, %s123
      %p125 = scmp.eq.s32.totalorder %s35, 0
      %p126 = por %p124, %p125
      %s127 = ssub.s32 %s37, %s44
      %p128 = scmp.eq.s32.totalorder %s127, 0
      %s130 = sadd.s32 %s129, 1
      %s131 = scalar_select %p128, %s129, %s130
      %p134 = pneg %p128
      %p135 = scmp.eq.s32.totalorder %s29, 1
      %p136 = por %p134, %p135
      %p137 = scmp.ne.s32.totalorder %s129, %s132
      %p138 = scmp.eq.s32.totalorder %s29, 0
      %p139 = por %p137, %p138
      %p140 = scmp.ne.s32.totalorder %s129, %s132
      %p141 = scmp.eq.s32.totalorder %s34, 1
      %p142 = por %p140, %p141
      %p143 = scmp.ne.s32.totalorder %s132, %s133
      %p144 = scmp.eq.s32.totalorder %s34, 0
      %p145 = por %p143, %p144
      %p146 = scmp.ne.s32.totalorder %s132, %s133
      %p147 = scmp.eq.s32.totalorder %s35, 1
      %p148 = por %p146, %p147
      %p150 = scmp.ne.s32.totalorder %s133, %s149
      %p151 = scmp.eq.s32.totalorder %s35, 0
      %p152 = por %p150, %p151
      %s153 = ssub.s32 %s37, %s44
      %p154 = scmp.eq.s32.totalorder %s153, 0
      %s156 = sadd.s32 %s155, 1
      %s157 = scalar_select %p154, %s155, %s156
      %p160 = pneg %p154
      %p161 = scmp.eq.s32.totalorder %s29, 1
      %p162 = por %p160, %p161
      %p163 = scmp.ne.s32.totalorder %s155, %s158
      %p164 = scmp.eq.s32.totalorder %s29, 0
      %p165 = por %p163, %p164
      %p166 = scmp.ne.s32.totalorder %s155, %s158
      %p167 = scmp.eq.s32.totalorder %s34, 1
      %p168 = por %p166, %p167
      %p169 = scmp.ne.s32.totalorder %s158, %s159
      %p170 = scmp.eq.s32.totalorder %s34, 0
      %p171 = por %p169, %p170
      %p172 = scmp.ne.s32.totalorder %s158, %s159
      %p173 = scmp.eq.s32.totalorder %s35, 1
      %p174 = por %p172, %p173
      %p176 = scmp.ne.s32.totalorder %s159, %s175
      %p177 = scmp.eq.s32.totalorder %s35, 0
      %p178 = por %p176, %p177
      %s179 = ssub.s32 %s37, %s44
      %p180 = scmp.eq.s32.totalorder %s179, 0
      %s182 = sadd.s32 %s181, 1
      %s183 = scalar_select %p180, %s181, %s182
      %p186 = pneg %p180
      %p187 = scmp.eq.s32.totalorder %s29, 1
      %p188 = por %p186, %p187
      %p189 = scmp.ne.s32.totalorder %s181, %s184
      %p190 = scmp.eq.s32.totalorder %s29, 0
      %p191 = por %p189, %p190
      %p192 = scmp.ne.s32.totalorder %s181, %s184
      %p193 = scmp.eq.s32.totalorder %s34, 1
      %p194 = por %p192, %p193
      %p195 = scmp.ne.s32.totalorder %s184, %s185
      %p196 = scmp.eq.s32.totalorder %s34, 0
      %p197 = por %p195, %p196
      %p198 = scmp.ne.s32.totalorder %s184, %s185
      %p199 = scmp.eq.s32.totalorder %s35, 1
      %p200 = por %p198, %p199
      %p202 = scmp.ne.s32.totalorder %s185, %s201
      %p203 = scmp.eq.s32.totalorder %s35, 0
      %p204 = por %p202, %p203
      %s205 = ssub.s32 %s37, %s44
      %p206 = scmp.eq.s32.totalorder %s205, 0
      %s208 = sadd.s32 %s207, 1
      %s209 = scalar_select %p206, %s207, %s208
      %p212 = pneg %p206
      %p213 = scmp.eq.s32.totalorder %s29, 1
      %p214 = por %p212, %p213
      %p215 = scmp.ne.s32.totalorder %s207, %s210
      %p216 = scmp.eq.s32.totalorder %s29, 0
      %p217 = por %p215, %p216
      %p218 = scmp.ne.s32.totalorder %s207, %s210
      %p219 = scmp.eq.s32.totalorder %s34, 1
      %p220 = por %p218, %p219
      %p221 = scmp.ne.s32.totalorder %s210, %s211
      %p222 = scmp.eq.s32.totalorder %s34, 0
      %p223 = por %p221, %p222
      %p224 = scmp.ne.s32.totalorder %s210, %s211
      %p225 = scmp.eq.s32.totalorder %s35, 1
      %p226 = por %p224, %p225
      %p228 = scmp.ne.s32.totalorder %s211, %s227
      %p229 = scmp.eq.s32.totalorder %s35, 0
      %p230 = por %p228, %p229
      %s231 = ssub.s32 %s37, %s44
      %p232 = scmp.eq.s32.totalorder %s231, 0
      %s234 = sadd.s32 %s233, 1
      %s235 = scalar_select %p232, %s233, %s234
      %p238 = pneg %p232
      %p239 = scmp.eq.s32.totalorder %s29, 1
      %p240 = por %p238, %p239
      %p241 = scmp.ne.s32.totalorder %s233, %s236
      %p242 = scmp.eq.s32.totalorder %s29, 0
      %p243 = por %p241, %p242
      %p244 = scmp.ne.s32.totalorder %s233, %s236
      %p245 = scmp.eq.s32.totalorder %s34, 1
      %p246 = por %p244, %p245
      %p247 = scmp.ne.s32.totalorder %s236, %s237
      %p248 = scmp.eq.s32.totalorder %s34, 0
      %p249 = por %p247, %p248
      %p250 = scmp.ne.s32.totalorder %s236, %s237
      %p251 = scmp.eq.s32.totalorder %s35, 1
      %p252 = por %p250, %p251
      %p254 = scmp.ne.s32.totalorder %s237, %s253
      %p255 = scmp.eq.s32.totalorder %s35, 0
      %p256 = por %p254, %p255
      %s257 = ssub.s32 %s37, %s44
      %p258 = scmp.eq.s32.totalorder %s257, 0
      %s260 = sadd.s32 %s259, 1
      %s261 = scalar_select %p258, %s259, %s260
      %p264 = pneg %p258
      %p265 = scmp.eq.s32.totalorder %s29, 1
      %p266 = por %p264, %p265
      %p267 = scmp.ne.s32.totalorder %s259, %s262
      %p268 = scmp.eq.s32.totalorder %s29, 0
      %p269 = por %p267, %p268
      %p270 = scmp.ne.s32.totalorder %s259, %s262
      %p271 = scmp.eq.s32.totalorder %s34, 1
      %p272 = por %p270, %p271
      %p273 = scmp.ne.s32.totalorder %s262, %s263
      %p274 = scmp.eq.s32.totalorder %s34, 0
      %p275 = por %p273, %p274
      %p276 = scmp.ne.s32.totalorder %s262, %s263
      %p277 = scmp.eq.s32.totalorder %s35, 1
      %p278 = por %p276, %p277
      %p280 = scmp.ne.s32.totalorder %s263, %s279
      %p281 = scmp.eq.s32.totalorder %s35, 0
      %p282 = por %p280, %p281
      %s283 = ssub.s32 %s37, %s44
      %p284 = scmp.eq.s32.totalorder %s283, 0
      %s286 = sadd.s32 %s285, 1
      %s287 = scalar_select %p284, %s285, %s286
      %p290 = pneg %p284
      %p291 = scmp.eq.s32.totalorder %s29, 1
      %p292 = por %p290, %p291
      %p293 = scmp.ne.s32.totalorder %s285, %s288
      %p294 = scmp.eq.s32.totalorder %s29, 0
      %p295 = por %p293, %p294
      %p296 = scmp.ne.s32.totalorder %s285, %s288
      %p297 = scmp.eq.s32.totalorder %s34, 1
      %p298 = por %p296, %p297
      %p299 = scmp.ne.s32.totalorder %s288, %s289
      %p300 = scmp.eq.s32.totalorder %s34, 0
      %p301 = por %p299, %p300
      %p302 = scmp.ne.s32.totalorder %s288, %s289
      %p303 = scmp.eq.s32.totalorder %s35, 1
      %p304 = por %p302, %p303
      %p306 = scmp.ne.s32.totalorder %s289, %s305
      %p307 = scmp.eq.s32.totalorder %s35, 0
      %p308 = por %p306, %p307
      %s309 = ssub.s32 %s37, %s44
      %p310 = scmp.eq.s32.totalorder %s309, 0
      %s312 = sadd.s32 %s311, 1
      %s313 = scalar_select %p310, %s311, %s312
      %p316 = pneg %p310
      %p317 = scmp.eq.s32.totalorder %s29, 1
      %p318 = por %p316, %p317
      %p319 = scmp.ne.s32.totalorder %s311, %s314
      %p320 = scmp.eq.s32.totalorder %s29, 0
      %p321 = por %p319, %p320
      %p322 = scmp.ne.s32.totalorder %s311, %s314
      %p323 = scmp.eq.s32.totalorder %s34, 1
      %p324 = por %p322, %p323
      %p325 = scmp.ne.s32.totalorder %s314, %s315
      %p326 = scmp.eq.s32.totalorder %s34, 0
      %p327 = por %p325, %p326
      %p328 = scmp.ne.s32.totalorder %s314, %s315
      %p329 = scmp.eq.s32.totalorder %s35, 1
      %p330 = por %p328, %p329
      %p332 = scmp.ne.s32.totalorder %s315, %s331
      %p333 = scmp.eq.s32.totalorder %s35, 0
      %p334 = por %p332, %p333
      %s335 = ssub.s32 %s37, %s44
      %p336 = scmp.eq.s32.totalorder %s335, 0
      %s338 = sadd.s32 %s337, 1
      %s339 = scalar_select %p336, %s337, %s338
      %p342 = pneg %p336
      %p343 = scmp.eq.s32.totalorder %s29, 1
      %p344 = por %p342, %p343
      %p345 = scmp.ne.s32.totalorder %s337, %s340
      %p346 = scmp.eq.s32.totalorder %s29, 0
      %p347 = por %p345, %p346
      %p348 = scmp.ne.s32.totalorder %s337, %s340
      %p349 = scmp.eq.s32.totalorder %s34, 1
      %p350 = por %p348, %p349
      %p351 = scmp.ne.s32.totalorder %s340, %s341
      %p352 = scmp.eq.s32.totalorder %s34, 0
      %p353 = por %p351, %p352
      %p354 = scmp.ne.s32.totalorder %s340, %s341
      %p355 = scmp.eq.s32.totalorder %s35, 1
      %p356 = por %p354, %p355
      %p358 = scmp.ne.s32.totalorder %s341, %s357
      %p359 = scmp.eq.s32.totalorder %s35, 0
      %p360 = por %p358, %p359
      %s361 = ssub.s32 %s36, %s48
      %p362 = scmp.eq.s32.totalorder %s361, 0
      %s364 = sadd.s32 %s363, 1
      %s365 = scalar_select %p362, %s363, %s364
      %p368 = pneg %p362
      %p369 = scmp.eq.s32.totalorder %s29, 1
      %p370 = por %p368, %p369
      %p371 = scmp.ne.s32.totalorder %s363, %s366
      %p372 = scmp.eq.s32.totalorder %s29, 0
      %p373 = por %p371, %p372
      %p374 = scmp.ne.s32.totalorder %s363, %s366
      %p375 = scmp.eq.s32.totalorder %s34, 1
      %p376 = por %p374, %p375
      %p377 = scmp.ne.s32.totalorder %s366, %s367
      %p378 = scmp.eq.s32.totalorder %s34, 0
      %p379 = por %p377, %p378
      %p380 = scmp.ne.s32.totalorder %s366, %s367
      %p381 = scmp.eq.s32.totalorder %s35, 1
      %p382 = por %p380, %p381
      %p384 = scmp.ne.s32.totalorder %s367, %s383
      %p385 = scmp.eq.s32.totalorder %s35, 0
      %p386 = por %p384, %p385
      %p387 = scmp.le.s32.totalorder 1, %s29
      %p388 = scmp.lt.s32.totalorder %s29, 3
      %p389 = pnand %p387, %p388
      %p390 = pneg %p389
      // Predicated region
      $region9: #{tpu_custom_call.1} parent=5 // pred_check
        _
      $region10: #{tpu_custom_call.1} parent=5 // pred_check_branch
        %392 = sbr.rel (%p389) target = $region12
      $region11: #{tpu_custom_call.1} parent=5 // pred_region
        %s393 = ssub.s32 %s29, 1
        // Predicated region
        $region13: #{tpu_custom_call.1} parent=11 // pred_check
          %p394 = pneg %p67
        $region14: #{tpu_custom_call.1} parent=11 // pred_check_branch
          %396 = sbr.rel (%p394) target = $region16
        $region15: #{tpu_custom_call.1} parent=11 // pred_region
          %s397 = smul.u32 2, %s38
          %s399 = ssub.s32 512, 512
          %400 = vsyncadd [#allocation4], %s399
          %s401 = smul.addr %s397, 2
          %s402 = smul.addr %s401, 128
          %s403 = scalar_lea.hbm %s0, %s402
          %s404 = sshll.u32 [#allocation3], 4
          %s405 = int_to_ptr.vmem [resolvable:$true] %s404
          %410 = dma.hbm_to_vmem [thread:$0]  %s403, 512, %s405, [#allocation4], 128, 128, 8
        $region16: #{tpu_custom_call.1} parent=11 // pred_fallthru
          _
      $region12: #{tpu_custom_call.1} parent=5 // pred_fallthru
        _
      %p411 = scmp.lt.s32.totalorder %s29, 2
      // Predicated region
      $region17: #{tpu_custom_call.1} parent=5 // pred_check
        %p412 = pneg %p411
      $region18: #{tpu_custom_call.1} parent=5 // pred_check_branch
        %414 = sbr.rel (%p412) target = $region20
      $region19: #{tpu_custom_call.1} parent=5 // pred_region
        // Predicated region
        $region21: #{tpu_custom_call.1} parent=19 // pred_check
          %p415 = pneg %p87
        $region22: #{tpu_custom_call.1} parent=19 // pred_check_branch
          %417 = sbr.rel (%p415) target = $region24
        $region23: #{tpu_custom_call.1} parent=19 // pred_region
          %p418 = scmp.lt.s32.totalorder %s37, 1
          %s419 = scalar_select %p418, %s37, 1
          %s420 = scalar_lea.vmem %s1, %s419
        $region24: #{tpu_custom_call.1} parent=19 // pred_fallthru
          _
        // Predicated region
        $region25: #{tpu_custom_call.1} parent=19 // pred_check
          %p421 = pneg %p113
        $region26: #{tpu_custom_call.1} parent=19 // pred_check_branch
          %423 = sbr.rel (%p421) target = $region28
        $region27: #{tpu_custom_call.1} parent=19 // pred_region
          %s424 = sand.u32 %s29, 1
          %s425 = scalar_lea.sflag [#allocation7], %s424
          %s426 = sand.u32 %s103, 1
          %s427 = scalar_lea.vmem [#allocation6], %s426
          %s429 = ssub.s32 16, 16
          %430 = vsyncadd %s425, %s429
          %s431 = smul.addr %s37, 16
          %s432 = scalar_lea.hbm %s2, %s431
          %s434 = sshll.u32 %s427, 4
          %s435 = int_to_ptr.vmem [resolvable:$true] %s434
          %437 = dma.hbm_to_vmem [thread:$0]  %s432, 16, %s435, %s425
        $region28: #{tpu_custom_call.1} parent=19 // pred_fallthru
          _
        // Predicated region
        $region29: #{tpu_custom_call.1} parent=19 // pred_check
          %p438 = pneg %p139
        $region30: #{tpu_custom_call.1} parent=19 // pred_check_branch
          %440 = sbr.rel (%p438) target = $region32
        $region31: #{tpu_custom_call.1} parent=19 // pred_region
          %s441 = sand.u32 %s29, 1
          %s442 = scalar_lea.sflag [#allocation7], %s441
          %s443 = sand.u32 %s129, 1
          %s444 = smul.addr %s443, 192
          %s445 = scalar_lea.vmem [#allocation8], %s444
          %s447 = ssub.s32 3072, 3072
          %448 = vsyncadd %s442, %s447
          %s449 = smul.addr %s37, 48
          %s450 = smul.addr %s449, 64
          %s451 = scalar_lea.hbm %s3, %s450
          %s452 = sshll.u32 %s445, 4
          %s453 = int_to_ptr.vmem [resolvable:$true] %s452
          %458 = dma.hbm_to_vmem [thread:$0]  %s451, 3072, %s453, %s442, 192, 192, 12
        $region32: #{tpu_custom_call.1} parent=19 // pred_fallthru
          _
        // Predicated region
        $region33: #{tpu_custom_call.1} parent=19 // pred_check
          %p459 = pneg %p165
        $region34: #{tpu_custom_call.1} parent=19 // pred_check_branch
          %461 = sbr.rel (%p459) target = $region36
        $region35: #{tpu_custom_call.1} parent=19 // pred_region
          %s462 = sand.u32 %s29, 1
          %s463 = scalar_lea.sflag [#allocation10], %s462
          %s464 = sand.u32 %s155, 1
          %s465 = smul.addr %s464, 64
          %s466 = scalar_lea.vmem [#allocation9], %s465
          %s468 = ssub.s32 1024, 1024
          %469 = vsyncadd %s463, %s468
          %s470 = smul.addr %s37, 16
          %s471 = smul.addr %s470, 64
          %s472 = scalar_lea.hbm %s4, %s471
          %s473 = sshll.u32 %s466, 4
          %s474 = int_to_ptr.vmem [resolvable:$true] %s473
          %479 = dma.hbm_to_vmem [thread:$0]  %s472, 1024, %s474, %s463, 64, 64, 4
        $region36: #{tpu_custom_call.1} parent=19 // pred_fallthru
          _
        // Predicated region
        $region37: #{tpu_custom_call.1} parent=19 // pred_check
          %p480 = pneg %p191
        $region38: #{tpu_custom_call.1} parent=19 // pred_check_branch
          %482 = sbr.rel (%p480) target = $region40
        $region39: #{tpu_custom_call.1} parent=19 // pred_region
          %p483 = scmp.lt.s32.totalorder %s37, 1
          %s484 = scalar_select %p483, %s37, 1
          %s485 = scalar_lea.vmem %s5, %s484
        $region40: #{tpu_custom_call.1} parent=19 // pred_fallthru
          _
        // Predicated region
        $region41: #{tpu_custom_call.1} parent=19 // pred_check
          %p486 = pneg %p217
        $region42: #{tpu_custom_call.1} parent=19 // pred_check_branch
          %488 = sbr.rel (%p486) target = $region44
        $region43: #{tpu_custom_call.1} parent=19 // pred_region
          %p489 = scmp.lt.s32.totalorder %s37, 1
          %s490 = scalar_select %p489, %s37, 1
          %s491 = scalar_lea.vmem %s6, %s490
        $region44: #{tpu_custom_call.1} parent=19 // pred_fallthru
          _
        // Predicated region
        $region45: #{tpu_custom_call.1} parent=19 // pred_check
          %p492 = pneg %p243
        $region46: #{tpu_custom_call.1} parent=19 // pred_check_branch
          %494 = sbr.rel (%p492) target = $region48
        $region47: #{tpu_custom_call.1} parent=19 // pred_region
          %p495 = scmp.lt.s32.totalorder %s37, 1
          %s496 = scalar_select %p495, %s37, 1
          %s497 = scalar_lea.vmem %s7, %s496
        $region48: #{tpu_custom_call.1} parent=19 // pred_fallthru
          _
        // Predicated region
        $region49: #{tpu_custom_call.1} parent=19 // pred_check
          %p498 = pneg %p269
        $region50: #{tpu_custom_call.1} parent=19 // pred_check_branch
          %500 = sbr.rel (%p498) target = $region52
        $region51: #{tpu_custom_call.1} parent=19 // pred_region
          %s501 = sand.u32 %s29, 1
          %s502 = scalar_lea.sflag [#allocation10], %s501
          %s503 = sand.u32 %s259, 1
          %s504 = smul.addr %s503, 128
          %s505 = scalar_lea.vmem [#allocation11], %s504
          %s507 = ssub.s32 2048, 2048
          %508 = vsyncadd %s502, %s507
          %s509 = smul.addr %s37, 32
          %s510 = smul.addr %s509, 64
          %s511 = scalar_lea.hbm %s8, %s510
          %s512 = sshll.u32 %s505, 4
          %s513 = int_to_ptr.vmem [resolvable:$true] %s512
          %518 = dma.hbm_to_vmem [thread:$0]  %s511, 2048, %s513, %s502, 128, 128, 8
        $region52: #{tpu_custom_call.1} parent=19 // pred_fallthru
          _
        // Predicated region
        $region53: #{tpu_custom_call.1} parent=19 // pred_check
          %p519 = pneg %p295
        $region54: #{tpu_custom_call.1} parent=19 // pred_check_branch
          %521 = sbr.rel (%p519) target = $region56
        $region55: #{tpu_custom_call.1} parent=19 // pred_region
          %p522 = scmp.lt.s32.totalorder %s37, 1
          %s523 = scalar_select %p522, %s37, 1
          %s524 = smul.addr %s523, 2
          %s525 = scalar_lea.vmem %s9, %s524
        $region56: #{tpu_custom_call.1} parent=19 // pred_fallthru
          _
        // Predicated region
        $region57: #{tpu_custom_call.1} parent=19 // pred_check
          %p526 = pneg %p321
        $region58: #{tpu_custom_call.1} parent=19 // pred_check_branch
          %528 = sbr.rel (%p526) target = $region60
        $region59: #{tpu_custom_call.1} parent=19 // pred_region
          %s529 = sand.u32 %s311, 1
          %s530 = scalar_lea.sflag [#allocation13], %s529
          %s531 = sand.u32 %s311, 1
          %s532 = smul.addr %s531, 128
          %s533 = scalar_lea.vmem [#allocation12], %s532
          %s535 = ssub.s32 2048, 2048
          %536 = vsyncadd %s530, %s535
          %s537 = smul.addr %s37, 32
          %s538 = smul.addr %s537, 64
          %s539 = scalar_lea.hbm %s10, %s538
          %s540 = sshll.u32 %s533, 4
          %s541 = int_to_ptr.vmem [resolvable:$true] %s540
          %546 = dma.hbm_to_vmem [thread:$0]  %s539, 2048, %s541, %s530, 64, 64, 4
        $region60: #{tpu_custom_call.1} parent=19 // pred_fallthru
          _
        // Predicated region
        $region61: #{tpu_custom_call.1} parent=19 // pred_check
          %p547 = pneg %p347
        $region62: #{tpu_custom_call.1} parent=19 // pred_check_branch
          %549 = sbr.rel (%p547) target = $region64
        $region63: #{tpu_custom_call.1} parent=19 // pred_region
          %p550 = scmp.lt.s32.totalorder %s37, 1
          %s551 = scalar_select %p550, %s37, 1
          %s552 = scalar_lea.vmem %s11, %s551
        $region64: #{tpu_custom_call.1} parent=19 // pred_fallthru
          _
      $region20: #{tpu_custom_call.1} parent=5 // pred_fallthru
        _
      %p553 = scmp.le.s32.totalorder 1, %s29
      %p554 = scmp.lt.s32.totalorder %s29, 3
      %p555 = pnand %p553, %p554
      %p556 = pneg %p555
      // Predicated region
      $region65: #{tpu_custom_call.1} parent=5 // pred_check
        _
      $region66: #{tpu_custom_call.1} parent=5 // pred_check_branch
        %558 = sbr.rel (%p555) target = $region68
      $region67: #{tpu_custom_call.1} parent=5 // pred_region
        %s559 = ssub.s32 %s29, 1
        // Predicated region
        $region69: #{tpu_custom_call.1} parent=67 // pred_check
          %p560 = pneg %p67
        $region70: #{tpu_custom_call.1} parent=67 // pred_check_branch
          %562 = sbr.rel (%p560) target = $region72
        $region71: #{tpu_custom_call.1} parent=67 // pred_region
          %563 = dma.done [#allocation4], 512
        $region72: #{tpu_custom_call.1} parent=67 // pred_fallthru
          _
        %s564 = sand.u32 %s34, 1
        %s565 = scalar_lea.sflag [#allocation7], %s564
        %s566 = sand.u32 %s106, 1
        %s567 = scalar_lea.vmem [#allocation6], %s566
        // Predicated region
        $region73: #{tpu_custom_call.1} parent=67 // pred_check
          %p568 = pneg %p119
        $region74: #{tpu_custom_call.1} parent=67 // pred_check_branch
          %570 = sbr.rel (%p568) target = $region76
        $region75: #{tpu_custom_call.1} parent=67 // pred_region
          %571 = dma.done %s565, 16
        $region76: #{tpu_custom_call.1} parent=67 // pred_fallthru
          _
        %s572 = sand.u32 %s34, 1
        %s573 = scalar_lea.sflag [#allocation7], %s572
        %s574 = sand.u32 %s132, 1
        %s575 = smul.addr %s574, 192
        %s576 = scalar_lea.vmem [#allocation8], %s575
        // Predicated region
        $region77: #{tpu_custom_call.1} parent=67 // pred_check
          %p577 = pneg %p145
        $region78: #{tpu_custom_call.1} parent=67 // pred_check_branch
          %579 = sbr.rel (%p577) target = $region80
        $region79: #{tpu_custom_call.1} parent=67 // pred_region
          %580 = dma.done %s573, 3072
        $region80: #{tpu_custom_call.1} parent=67 // pred_fallthru
          _
        %s581 = sand.u32 %s34, 1
        %s582 = scalar_lea.sflag [#allocation10], %s581
        %s583 = sand.u32 %s158, 1
        %s584 = smul.addr %s583, 64
        %s585 = scalar_lea.vmem [#allocation9], %s584
        // Predicated region
        $region81: #{tpu_custom_call.1} parent=67 // pred_check
          %p586 = pneg %p171
        $region82: #{tpu_custom_call.1} parent=67 // pred_check_branch
          %588 = sbr.rel (%p586) target = $region84
        $region83: #{tpu_custom_call.1} parent=67 // pred_region
          %589 = dma.done %s582, 1024
        $region84: #{tpu_custom_call.1} parent=67 // pred_fallthru
          _
        %s590 = sand.u32 %s34, 1
        %s591 = scalar_lea.sflag [#allocation10], %s590
        %s592 = sand.u32 %s262, 1
        %s593 = smul.addr %s592, 128
        %s594 = scalar_lea.vmem [#allocation11], %s593
        // Predicated region
        $region85: #{tpu_custom_call.1} parent=67 // pred_check
          %p595 = pneg %p275
        $region86: #{tpu_custom_call.1} parent=67 // pred_check_branch
          %597 = sbr.rel (%p595) target = $region88
        $region87: #{tpu_custom_call.1} parent=67 // pred_region
          %598 = dma.done %s591, 2048
        $region88: #{tpu_custom_call.1} parent=67 // pred_fallthru
          _
        %s599 = sand.u32 %s314, 1
        %s600 = scalar_lea.sflag [#allocation13], %s599
        %s601 = sand.u32 %s314, 1
        %s602 = smul.addr %s601, 128
        %s603 = scalar_lea.vmem [#allocation12], %s602
        // Predicated region
        $region89: #{tpu_custom_call.1} parent=67 // pred_check
          %p604 = pneg %p327
        $region90: #{tpu_custom_call.1} parent=67 // pred_check_branch
          %606 = sbr.rel (%p604) target = $region92
        $region91: #{tpu_custom_call.1} parent=67 // pred_region
          %607 = dma.done %s600, 2048
        $region92: #{tpu_custom_call.1} parent=67 // pred_fallthru
          _
        %p608 = pneg %p67
        %p609 = pneg %p64
        %p610 = scmp.lt.s32.totalorder %s39, 1
        %s611 = scalar_select %p610, %s39, 1
        %s612 = scalar_lea.vmem %s1, %s611
        %p613 = pneg %p93
        %p614 = pneg %p90
        %s615 = sand.u32 %s34, 1
        %s616 = scalar_lea.sflag [#allocation7], %s615
        %s617 = sand.u32 %s106, 1
        %s618 = scalar_lea.vmem [#allocation6], %s617
        %p619 = pneg %p119
        %p620 = pneg %p116
        %s621 = sand.u32 %s34, 1
        %s622 = scalar_lea.sflag [#allocation7], %s621
        %s623 = sand.u32 %s132, 1
        %s624 = smul.addr %s623, 192
        %s625 = scalar_lea.vmem [#allocation8], %s624
        %p626 = pneg %p145
        %p627 = pneg %p142
        %s628 = sand.u32 %s34, 1
        %s629 = scalar_lea.sflag [#allocation10], %s628
        %s630 = sand.u32 %s158, 1
        %s631 = smul.addr %s630, 64
        %s632 = scalar_lea.vmem [#allocation9], %s631
        %p633 = pneg %p171
        %p634 = pneg %p168
        %p635 = scmp.lt.s32.totalorder %s39, 1
        %s636 = scalar_select %p635, %s39, 1
        %s637 = scalar_lea.vmem %s5, %s636
        %p638 = pneg %p197
        %p639 = pneg %p194
        %p640 = scmp.lt.s32.totalorder %s39, 1
        %s641 = scalar_select %p640, %s39, 1
        %s642 = scalar_lea.vmem %s6, %s641
        %p643 = pneg %p223
        %p644 = pneg %p220
        %p645 = scmp.lt.s32.totalorder %s39, 1
        %s646 = scalar_select %p645, %s39, 1
        %s647 = scalar_lea.vmem %s7, %s646
        %p648 = pneg %p249
        %p649 = pneg %p246
        %s650 = sand.u32 %s34, 1
        %s651 = scalar_lea.sflag [#allocation10], %s650
        %s652 = sand.u32 %s262, 1
        %s653 = smul.addr %s652, 128
        %s654 = scalar_lea.vmem [#allocation11], %s653
        %p655 = pneg %p275
        %p656 = pneg %p272
        %p657 = scmp.lt.s32.totalorder %s39, 1
        %s658 = scalar_select %p657, %s39, 1
        %s659 = smul.addr %s658, 2
        %s660 = scalar_lea.vmem %s9, %s659
        %p661 = pneg %p301
        %p662 = pneg %p298
        %s663 = sand.u32 %s314, 1
        %s664 = scalar_lea.sflag [#allocation13], %s663
        %s665 = sand.u32 %s314, 1
        %s666 = smul.addr %s665, 128
        %s667 = scalar_lea.vmem [#allocation12], %s666
        %p668 = pneg %p327
        %p669 = pneg %p324
        %p670 = scmp.lt.s32.totalorder %s39, 1
        %s671 = scalar_select %p670, %s39, 1
        %s672 = scalar_lea.vmem %s11, %s671
        %p673 = pneg %p353
        %p674 = pneg %p350
        %p675 = pneg %p379
        %p676 = pneg %p376
        %s677 = smul.u32 2, %s38
        %p678 = scmp.lt.s32.totalorder %s39, 1
        %s679 = scalar_select %p678, %s39, 1
        %s680 = scalar_lea.vmem %s1, %s679
        %p681 = scmp.lt.s32.totalorder %s39, 1
        %s682 = scalar_select %p681, %s39, 1
        %s683 = scalar_lea.vmem %s5, %s682
        %p684 = scmp.lt.s32.totalorder %s39, 1
        %s685 = scalar_select %p684, %s39, 1
        %s686 = scalar_lea.vmem %s6, %s685
        %p687 = scmp.lt.s32.totalorder %s39, 1
        %s688 = scalar_select %p687, %s39, 1
        %s689 = scalar_lea.vmem %s7, %s688
        %p690 = scmp.lt.s32.totalorder %s39, 1
        %s691 = scalar_select %p690, %s39, 1
        %s692 = smul.addr %s691, 2
        %s693 = scalar_lea.vmem %s9, %s692
        %p694 = scmp.lt.s32.totalorder %s39, 1
        %s695 = scalar_select %p694, %s39, 1
        %s696 = scalar_lea.vmem %s11, %s695
        %s697 = smul.u32 2, %s38
        %p699 = scmp.eq.s32.totalorder %s39, 0
        // Predicated region
        $region93: #{tpu_custom_call.1} parent=67 // pred_check
          %p700 = pneg %p699
        $region94: #{tpu_custom_call.1} parent=67 // pred_check_branch
          %702 = sbr.rel (%p700) target = $region96
        $region95: #{tpu_custom_call.1} parent=67 // pred_region
          %v703 = vld [vmem:[#allocation3] sm:$0xff]
          %v704 = vld [vmem:[#allocation3 + $0x8] sm:$0xff]
          %v705 = vld [vmem:[#allocation3 + $0x10] sm:$0xff]
          %v706 = vld [vmem:[#allocation3 + $0x18] sm:$0xff]
          %707 = vst [vmem:[#allocation2] sm:$0xff] %v703
          %708 = vst [vmem:[#allocation2 + $0x8] sm:$0xff] %v704
          %709 = vst [vmem:[#allocation2 + $0x10] sm:$0xff] %v705
          %710 = vst [vmem:[#allocation2 + $0x18] sm:$0xff] %v706
        $region96: #{tpu_custom_call.1} parent=67 // pred_fallthru
          _
        %v711 = vld [vmem:[#allocation2] sm:$0xff]
        %v712 = vld [vmem:[#allocation2 + $0x8] sm:$0xff]
        %v713 = vld [vmem:[#allocation2 + $0x10] sm:$0xff]
        %v714 = vld [vmem:[#allocation2 + $0x18] sm:$0xff]
        %v715 = vld [vmem:[%s680] sm:$0x1]
        %v716 = vld [vmem:[%s567] sm:$0x1]
        %717 = vadd.xlane.f32.xlu0 %v711
        %v718 = vpop.xlane.xlu0 %717
        %719 = vadd.xlane.f32.xlu0 %v712
        %v720 = vpop.xlane.xlu0 %719
        %721 = vadd.xlane.f32.xlu0 %v713
        %v722 = vpop.xlane.xlu0 %721
        %723 = vadd.xlane.f32.xlu0 %v714
        %v724 = vpop.xlane.xlu0 %723
        %v725 = vrcp.pop 128.0
        %v726 = vmul.f32 %v718, %v725
        %v727 = vmul.f32 %v720, %v725
        %v728 = vmul.f32 %v722, %v725
        %v729 = vmul.f32 %v724, %v725
        %v730 = vsub.f32 %v711, %v726
        %v731 = vsub.f32 %v712, %v727
        %v732 = vsub.f32 %v713, %v728
        %v733 = vsub.f32 %v714, %v729
        %v734 = vmul.f32 %v730, %v730
        %v735 = vmul.f32 %v731, %v731
        %v736 = vmul.f32 %v732, %v732
        %v737 = vmul.f32 %v733, %v733
        %738 = vadd.xlane.f32.xlu0 %v734
        %v739 = vpop.xlane.xlu0 %738
        %740 = vadd.xlane.f32.xlu0 %v735
        %v741 = vpop.xlane.xlu0 %740
        %742 = vadd.xlane.f32.xlu0 %v736
        %v743 = vpop.xlane.xlu0 %742
        %744 = vadd.xlane.f32.xlu0 %v737
        %v745 = vpop.xlane.xlu0 %744
        %v746 = vmul.f32 %v739, %v725
        %v747 = vmul.f32 %v741, %v725
        %v748 = vmul.f32 %v743, %v725
        %v749 = vmul.f32 %v745, %v725
        %v750 = vadd.f32 %v746, 1e-05
        %v751 = vadd.f32 %v747, 1e-05
        %v752 = vadd.f32 %v748, 1e-05
        %v753 = vadd.f32 %v749, 1e-05
        %v754 = vrsqrt.pop %v750
        %v755 = vrsqrt.pop %v751
        %v756 = vrsqrt.pop %v752
        %v757 = vrsqrt.pop %v753
        %v758 = vmul.f32 %v730, %v754
        %v759 = vmul.f32 %v731, %v755
        %v760 = vmul.f32 %v732, %v756
        %v761 = vmul.f32 %v733, %v757
        %v763 = vlaneseq
        %v764 = vshrl.u32 %v763, 7
        %v765 = vsub.s32 0, %v764
        %v766 = vrot.slane %v715, %v765
        %v768 = vmul.f32 %v758, %v766
        %v769 = vmul.f32 %v759, %v766
        %v770 = vmul.f32 %v760, %v766
        %v771 = vmul.f32 %v761, %v766
        %v773 = vlaneseq
        %v774 = vshrl.u32 %v773, 7
        %v775 = vsub.s32 0, %v774
        %v776 = vrot.slane %v716, %v775
        %v778 = vadd.f32 %v768, %v776
        %v779 = vadd.f32 %v769, %v776
        %v780 = vadd.f32 %v770, %v776
        %v781 = vadd.f32 %v771, %v776
        %v782 = vpack.c.bf16 %v779, %v778
        %v783 = vpack.c.bf16 %v781, %v780
        %v784 = vld [vmem:[%s576] sm:$0xff]
        %v785 = vld [vmem:[%s576 + $0x8] sm:$0xf]
        %v786 = vld [vmem:[%s576 + $0xc] sm:$0xff]
        %v787 = vld [vmem:[%s576 + $0x14] sm:$0xf]
        %v788 = vld [vmem:[%s576 + $0x18] sm:$0xff]
        %v789 = vld [vmem:[%s576 + $0x20] sm:$0xf]
        %v790 = vld [vmem:[%s576 + $0x24] sm:$0xff]
        %v791 = vld [vmem:[%s576 + $0x2c] sm:$0xf]
        %v792 = vld [vmem:[%s576 + $0x30] sm:$0xff]
        %v793 = vld [vmem:[%s576 + $0x38] sm:$0xf]
        %v794 = vld [vmem:[%s576 + $0x3c] sm:$0xff]
        %v795 = vld [vmem:[%s576 + $0x44] sm:$0xf]
        %v796 = vld [vmem:[%s576 + $0x48] sm:$0xff]
        %v797 = vld [vmem:[%s576 + $0x50] sm:$0xf]
        %v798 = vld [vmem:[%s576 + $0x54] sm:$0xff]
        %v799 = vld [vmem:[%s576 + $0x5c] sm:$0xf]
        %v800 = vld [vmem:[%s576 + $0x60] sm:$0xff]
        %v801 = vld [vmem:[%s576 + $0x68] sm:$0xf]
        %v802 = vld [vmem:[%s576 + $0x6c] sm:$0xff]
        %v803 = vld [vmem:[%s576 + $0x74] sm:$0xf]
        %v804 = vld [vmem:[%s576 + $0x78] sm:$0xff]
        %v805 = vld [vmem:[%s576 + $0x80] sm:$0xf]
        %v806 = vld [vmem:[%s576 + $0x84] sm:$0xff]
        %v807 = vld [vmem:[%s576 + $0x8c] sm:$0xf]
        %v808 = vld [vmem:[%s576 + $0x90] sm:$0xff]
        %v809 = vld [vmem:[%s576 + $0x98] sm:$0xf]
        %v810 = vld [vmem:[%s576 + $0x9c] sm:$0xff]
        %v811 = vld [vmem:[%s576 + $0xa4] sm:$0xf]
        %v812 = vld [vmem:[%s576 + $0xa8] sm:$0xff]
        %v813 = vld [vmem:[%s576 + $0xb0] sm:$0xf]
        %v814 = vld [vmem:[%s576 + $0xb4] sm:$0xff]
        %v815 = vld [vmem:[%s576 + $0xbc] sm:$0xf]
        %v848 = vunpack.c.l.b16 %v784
        %v849 = vunpack.c.h.b16 %v784
        %v850 = vunpack.c.l.b16 %v785
        %v851 = vunpack.c.l.b16 %v786
        %v852 = vunpack.c.h.b16 %v786
        %v853 = vunpack.c.l.b16 %v787
        %v854 = vunpack.c.l.b16 %v788
        %v855 = vunpack.c.h.b16 %v788
        %v856 = vunpack.c.l.b16 %v789
        %v857 = vunpack.c.l.b16 %v790
        %v858 = vunpack.c.h.b16 %v790
        %v859 = vunpack.c.l.b16 %v791
        %v860 = vunpack.c.l.b16 %v792
        %v861 = vunpack.c.h.b16 %v792
        %v862 = vunpack.c.l.b16 %v793
        %v863 = vunpack.c.l.b16 %v794
        %v864 = vunpack.c.h.b16 %v794
        %v865 = vunpack.c.l.b16 %v795
        %v866 = vunpack.c.l.b16 %v796
        %v867 = vunpack.c.h.b16 %v796
        %v868 = vunpack.c.l.b16 %v797
        %v869 = vunpack.c.l.b16 %v798
        %v870 = vunpack.c.h.b16 %v798
        %v871 = vunpack.c.l.b16 %v799
        %v872 = vunpack.c.l.b16 %v800
        %v873 = vunpack.c.h.b16 %v800
        %v874 = vunpack.c.l.b16 %v801
        %v875 = vunpack.c.l.b16 %v802
        %v876 = vunpack.c.h.b16 %v802
        %v877 = vunpack.c.l.b16 %v803
        %v878 = vunpack.c.l.b16 %v804
        %v879 = vunpack.c.h.b16 %v804
        %v880 = vunpack.c.l.b16 %v805
        %v881 = vunpack.c.l.b16 %v806
        %v882 = vunpack.c.h.b16 %v806
        %v883 = vunpack.c.l.b16 %v807
        %v884 = vunpack.c.l.b16 %v808
        %v885 = vunpack.c.h.b16 %v808
        %v886 = vunpack.c.l.b16 %v809
        %v887 = vunpack.c.l.b16 %v810
        %v888 = vunpack.c.h.b16 %v810
        %v889 = vunpack.c.l.b16 %v811
        %v890 = vunpack.c.l.b16 %v812
        %v891 = vunpack.c.h.b16 %v812
        %v892 = vunpack.c.l.b16 %v813
        %v893 = vunpack.c.l.b16 %v814
        %v894 = vunpack.c.h.b16 %v814
        %v895 = vunpack.c.l.b16 %v815
        %v896 = vpack.c.b16 %v851, %v848
        %v897 = vpack.c.b16 %v852, %v849
        %v898 = vpack.c.b16 %v853, %v850
        %v899 = vpack.c.b16 %v857, %v854
        %v900 = vpack.c.b16 %v858, %v855
        %v901 = vpack.c.b16 %v859, %v856
        %v902 = vpack.c.b16 %v863, %v860
        %v903 = vpack.c.b16 %v864, %v861
        %v904 = vpack.c.b16 %v865, %v862
        %v905 = vpack.c.b16 %v869, %v866
        %v906 = vpack.c.b16 %v870, %v867
        %v907 = vpack.c.b16 %v871, %v868
        %v908 = vpack.c.b16 %v875, %v872
        %v909 = vpack.c.b16 %v876, %v873
        %v910 = vpack.c.b16 %v877, %v874
        %v911 = vpack.c.b16 %v881, %v878
        %v912 = vpack.c.b16 %v882, %v879
        %v913 = vpack.c.b16 %v883, %v880
        %v914 = vpack.c.b16 %v887, %v884
        %v915 = vpack.c.b16 %v888, %v885
        %v916 = vpack.c.b16 %v889, %v886
        %v917 = vpack.c.b16 %v893, %v890
        %v918 = vpack.c.b16 %v894, %v891
        %v919 = vpack.c.b16 %v895, %v892
        %944 = vmatprep.subr.bf16.mxu0 %v897
        %945 = vmatpush1.bf16.msra.mxu0 %v896
        %946 = vmatprep.subr.bf16.mxu0 %v900
        %947 = vmatpush1.bf16.msra.mxu0 %v899
        %948 = vmatprep.subr.bf16.mxu0 %v903
        %949 = vmatpush1.bf16.msra.mxu0 %v902
        %950 = vmatprep.subr.bf16.mxu0 %v906
        %951 = vmatpush1.bf16.msra.mxu0 %v905
        %952 = vmatprep.subr.bf16.mxu0 %v909
        %953 = vmatpush1.bf16.msra.mxu0 %v908
        %954 = vmatprep.subr.bf16.mxu0 %v912
        %955 = vmatpush1.bf16.msra.mxu0 %v911
        %956 = vmatprep.subr.bf16.mxu0 %v915
        %957 = vmatpush1.bf16.msra.mxu0 %v914
        %958 = vmatprep.subr.bf16.mxu0 %v918
        %959 = vmatpush1.bf16.msra.mxu0 %v917
        %960 = vmatprep.subr.bf16.mxu0 0
        %961 = vmatpush1.bf16.msra.mxu0 0
        %962 = vmatprep.subr.bf16.mxu0 0
        %963 = vmatpush1.bf16.msra.mxu0 0
        %964 = vmatprep.subr.bf16.mxu0 0
        %965 = vmatpush1.bf16.msra.mxu0 0
        %966 = vmatprep.subr.bf16.mxu0 0
        %967 = vmatpush1.bf16.msra.mxu0 0
        %968 = vmatprep.subr.bf16.mxu0 0
        %969 = vmatpush1.bf16.msra.mxu0 0
        %970 = vmatprep.subr.bf16.mxu0 0
        %971 = vmatpush1.bf16.msra.mxu0 0
        %972 = vmatprep.subr.bf16.mxu0 0
        %973 = vmatpush1.bf16.msra.mxu0 0
        %974 = vmatprep.subr.bf16.mxu0 0
        %975 = vmatpush1.bf16.msra.mxu0 0
        %976 = vmatprep.mubr.bf16.mxu0 0
        %977 = vmatmul.mubr.bf16.gmra.mrb[0].mxu0 %v782
        %v978 = vpop.f32.mrb[0].mxu0
        %v979 = vadd.f32 0.0, %v978
        %v980 = vpop.f32.mrb[0].mxu0
        %v981 = vadd.f32 0.0, %v980
        %v982 = vpop.f32.mrb[0].mxu0
        %v983 = vadd.f32 0.0, %v982
        %v984 = vpop.f32.mrb[0].mxu0
        %v985 = vadd.f32 0.0, %v984
        %986 = vmatprep.mubr.bf16.mxu0 0
        %987 = vmatmul.mubr.bf16.gmra.mrb[0].mxu0 %v783
        %v988 = vpop.f32.mrb[0].mxu0
        %v989 = vadd.f32 0.0, %v988
        %v990 = vpop.f32.mrb[0].mxu0
        %v991 = vadd.f32 0.0, %v990
        %v992 = vpop.f32.mrb[0].mxu0
        %v993 = vadd.f32 0.0, %v992
        %v994 = vpop.f32.mrb[0].mxu0
        %v995 = vadd.f32 0.0, %v994
        %996 = vdwg.mxu0
        %997 = vmatprep.subr.bf16.mxu0 0
        %998 = vmatpush1.bf16.msra.mxu0 %v898
        %999 = vmatprep.subr.bf16.mxu0 0
        %1000 = vmatpush1.bf16.msra.mxu0 %v901
        %1001 = vmatprep.subr.bf16.mxu0 0
        %1002 = vmatpush1.bf16.msra.mxu0 %v904
        %1003 = vmatprep.subr.bf16.mxu0 0
        %1004 = vmatpush1.bf16.msra.mxu0 %v907
        %1005 = vmatprep.subr.bf16.mxu0 0
        %1006 = vmatpush1.bf16.msra.mxu0 %v910
        %1007 = vmatprep.subr.bf16.mxu0 0
        %1008 = vmatpush1.bf16.msra.mxu0 %v913
        %1009 = vmatprep.subr.bf16.mxu0 0
        %1010 = vmatpush1.bf16.msra.mxu0 %v916
        %1011 = vmatprep.subr.bf16.mxu0 0
        %1012 = vmatpush1.bf16.msra.mxu0 %v919
        %1013 = vmatprep.subr.bf16.mxu0 0
        %1014 = vmatpush1.bf16.msra.mxu0 0
        %1015 = vmatprep.subr.bf16.mxu0 0
        %1016 = vmatpush1.bf16.msra.mxu0 0
        %1017 = vmatprep.subr.bf16.mxu0 0
        %1018 = vmatpush1.bf16.msra.mxu0 0
        %1019 = vmatprep.subr.bf16.mxu0 0
        %1020 = vmatpush1.bf16.msra.mxu0 0
        %1021 = vmatprep.subr.bf16.mxu0 0
        %1022 = vmatpush1.bf16.msra.mxu0 0
        %1023 = vmatprep.subr.bf16.mxu0 0
        %1024 = vmatpush1.bf16.msra.mxu0 0
        %1025 = vmatprep.subr.bf16.mxu0 0
        %1026 = vmatpush1.bf16.msra.mxu0 0
        %1027 = vmatprep.subr.bf16.mxu0 0
        %1028 = vmatpush1.bf16.msra.mxu0 0
        %1029 = vmatprep.mubr.bf16.mxu0 0
        %1030 = vmatmul.mubr.bf16.gmra.mrb[0].mxu0 %v782
        %v1031 = vpop.f32.mrb[0].mxu0
        %v1032 = vadd.f32 0.0, %v1031
        %v1033 = vpop.f32.mrb[0].mxu0
        %v1034 = vpop.f32.mrb[0].mxu0
        %v1035 = vadd.f32 0.0, %v1034
        %v1036 = vpop.f32.mrb[0].mxu0
        %1037 = vmatprep.mubr.bf16.mxu0 0
        %1038 = vmatmul.mubr.bf16.gmra.mrb[0].mxu0 %v783
        %v1039 = vpop.f32.mrb[0].mxu0
        %v1040 = vadd.f32 0.0, %v1039
        %v1041 = vpop.f32.mrb[0].mxu0
        %v1042 = vpop.f32.mrb[0].mxu0
        %v1043 = vadd.f32 0.0, %v1042
        %v1044 = vpop.f32.mrb[0].mxu0
        %1045 = vdwg.mxu0
        %v1046 = vmul.f32 %v979, 0.17677669
        %v1047 = vmul.f32 %v983, 0.17677669
        %v1048 = vmul.f32 %v989, 0.17677669
        %v1049 = vmul.f32 %v993, 0.17677669
        %v1050 = vpack.c.bf16 %v1047, %v1046
        %v1051 = vpack.c.bf16 %v1049, %v1048
        %v1052 = vpack.c.bf16 %v985, %v981
        %v1053 = vpack.c.bf16 %v995, %v991
        %v1054 = vpack.c.bf16 %v1035, %v1032
        %v1055 = vpack.c.bf16 %v1043, %v1040
        %1058 = vrot.lane.b32.xlu0 %v1050, 96
        %v1059 = vpop.permute.xlu0 %1058
        %1060 = vrot.lane.b32.xlu0 %v1051, 96
        %v1061 = vpop.permute.xlu0 %1060
        %1062 = vrot.lane.b32.xlu0 %v1050, 64
        %v1063 = vpop.permute.xlu0 %1062
        %1064 = vrot.lane.b32.xlu0 %v1051, 64
        %v1065 = vpop.permute.xlu0 %1064
        %1066 = vrot.lane.b32.xlu0 %v1050, 32
        %v1067 = vpop.permute.xlu0 %1066
        %1068 = vrot.lane.b32.xlu0 %v1051, 32
        %v1069 = vpop.permute.xlu0 %1068
        %1072 = vrot.lane.b32.xlu0 %v1052, 96
        %v1073 = vpop.permute.xlu0 %1072
        %1074 = vrot.lane.b32.xlu0 %v1053, 96
        %v1075 = vpop.permute.xlu0 %1074
        %1076 = vrot.lane.b32.xlu0 %v1052, 64
        %v1077 = vpop.permute.xlu0 %1076
        %1078 = vrot.lane.b32.xlu0 %v1053, 64
        %v1079 = vpop.permute.xlu0 %1078
        %1080 = vrot.lane.b32.xlu0 %v1052, 32
        %v1081 = vpop.permute.xlu0 %1080
        %1082 = vrot.lane.b32.xlu0 %v1053, 32
        %v1083 = vpop.permute.xlu0 %1082
        %1086 = vrot.lane.b32.xlu0 %v1054, 96
        %v1087 = vpop.permute.xlu0 %1086
        %1088 = vrot.lane.b32.xlu0 %v1055, 96
        %v1089 = vpop.permute.xlu0 %1088
        %1092 = vrot.lane.b32.xlu0 %v1054, 64
        %v1093 = vpop.permute.xlu0 %1092
        %1094 = vrot.lane.b32.xlu0 %v1055, 64
        %v1095 = vpop.permute.xlu0 %1094
        %1098 = vrot.lane.b32.xlu0 %v1054, 32
        %v1099 = vpop.permute.xlu0 %1098
        %1100 = vrot.lane.b32.xlu0 %v1055, 32
        %v1101 = vpop.permute.xlu0 %1100
        %vm1104 = vcmask 261120
        %v1106 = vsel %vm1104, %v1050, 0
        %v1109 = vsel %vm1104, %v1052, 0
        %1111 = vmatprep.subr.bf16.mxu0 0
        %1112 = vmatpush1.bf16.xpose.msra.mxu0 %v1109
        %1113 = vmatprep.subr.bf16.mxu0 0
        %1114 = vmatpush1.bf16.xpose.msra.mxu0 0
        %1115 = vmatprep.subr.bf16.mxu0 0
        %1116 = vmatpush1.bf16.xpose.msra.mxu0 0
        %1117 = vmatprep.subr.bf16.mxu0 0
        %1118 = vmatpush1.bf16.xpose.msra.mxu0 0
        %1119 = vmatprep.subr.bf16.mxu0 0
        %1120 = vmatpush1.bf16.xpose.msra.mxu0 0
        %1121 = vmatprep.subr.bf16.mxu0 0
        %1122 = vmatpush1.bf16.xpose.msra.mxu0 0
        %1123 = vmatprep.subr.bf16.mxu0 0
        %1124 = vmatpush1.bf16.xpose.msra.mxu0 0
        %1125 = vmatprep.subr.bf16.mxu0 0
        %1126 = vmatpush1.bf16.xpose.msra.mxu0 0
        %1127 = vmatprep.subr.bf16.mxu0 0
        %1128 = vmatpush1.bf16.xpose.msra.mxu0 0
        %1129 = vmatprep.subr.bf16.mxu0 0
        %1130 = vmatpush1.bf16.xpose.msra.mxu0 0
        %1131 = vmatprep.subr.bf16.mxu0 0
        %1132 = vmatpush1.bf16.xpose.msra.mxu0 0
        %1133 = vmatprep.subr.bf16.mxu0 0
        %1134 = vmatpush1.bf16.xpose.msra.mxu0 0
        %1135 = vmatprep.subr.bf16.mxu0 0
        %1136 = vmatpush1.bf16.xpose.msra.mxu0 0
        %1137 = vmatprep.subr.bf16.mxu0 0
        %1138 = vmatpush1.bf16.xpose.msra.mxu0 0
        %1139 = vmatprep.subr.bf16.mxu0 0
        %1140 = vmatpush1.bf16.xpose.msra.mxu0 0
        %1141 = vmatprep.subr.bf16.mxu0 0
        %1142 = vmatpush1.bf16.xpose.msra.mxu0 0
        %1143 = vmatprep.mubr.bf16.mxu0 0
        %1144 = vmatmul.mubr.bf16.gmra.mrb[0].mxu0 %v1106
        %v1145 = vpop.f32.mrb[0].mxu0
        %v1146 = vadd.f32 0.0, %v1145
        %v1147 = vpop.f32.mrb[0].mxu0
        %v1148 = vpop.f32.mrb[0].mxu0
        %v1149 = vadd.f32 0.0, %v1148
        %v1150 = vpop.f32.mrb[0].mxu0
        %1151 = vdwg.mxu0
        %v1153 = vsel %vm1104, %v1051, 0
        %v1156 = vsel %vm1104, %v1053, 0
        %1158 = vmatprep.subr.bf16.mxu0 0
        %1159 = vmatpush1.bf16.xpose.msra.mxu0 %v1156
        %1160 = vmatprep.subr.bf16.mxu0 0
        %1161 = vmatpush1.bf16.xpose.msra.mxu0 0
        %1162 = vmatprep.subr.bf16.mxu0 0
        %1163 = vmatpush1.bf16.xpose.msra.mxu0 0
        %1164 = vmatprep.subr.bf16.mxu0 0
        %1165 = vmatpush1.bf16.xpose.msra.mxu0 0
        %1166 = vmatprep.subr.bf16.mxu0 0
        %1167 = vmatpush1.bf16.xpose.msra.mxu0 0
        %1168 = vmatprep.subr.bf16.mxu0 0
        %1169 = vmatpush1.bf16.xpose.msra.mxu0 0
        %1170 = vmatprep.subr.bf16.mxu0 0
        %1171 = vmatpush1.bf16.xpose.msra.mxu0 0
        %1172 = vmatprep.subr.bf16.mxu0 0
        %1173 = vmatpush1.bf16.xpose.msra.mxu0 0
        %1174 = vmatprep.subr.bf16.mxu0 0
        %1175 = vmatpush1.bf16.xpose.msra.mxu0 0
        %1176 = vmatprep.subr.bf16.mxu0 0
        %1177 = vmatpush1.bf16.xpose.msra.mxu0 0
        %1178 = vmatprep.subr.bf16.mxu0 0
        %1179 = vmatpush1.bf16.xpose.msra.mxu0 0
        %1180 = vmatprep.subr.bf16.mxu0 0
        %1181 = vmatpush1.bf16.xpose.msra.mxu0 0
        %1182 = vmatprep.subr.bf16.mxu0 0
        %1183 = vmatpush1.bf16.xpose.msra.mxu0 0
        %1184 = vmatprep.subr.bf16.mxu0 0
        %1185 = vmatpush1.bf16.xpose.msra.mxu0 0
        %1186 = vmatprep.subr.bf16.mxu0 0
        %1187 = vmatpush1.bf16.xpose.msra.mxu0 0
        %1188 = vmatprep.subr.bf16.mxu0 0
        %1189 = vmatpush1.bf16.xpose.msra.mxu0 0
        %1190 = vmatprep.mubr.bf16.mxu0 0
        %1191 = vmatmul.mubr.bf16.gmra.mrb[0].mxu0 %v1153
        %v1192 = vpop.f32.mrb[0].mxu0
        %v1193 = vadd.f32 0.0, %v1192
        %v1194 = vpop.f32.mrb[0].mxu0
        %v1195 = vpop.f32.mrb[0].mxu0
        %v1196 = vadd.f32 0.0, %v1195
        %v1197 = vpop.f32.mrb[0].mxu0
        %1198 = vdwg.mxu0
        %v1200 = vsel %vm1104, %v1059, 0
        %v1203 = vsel %vm1104, %v1073, 0
        %1205 = vmatprep.subr.bf16.mxu0 0
        %1206 = vmatpush1.bf16.xpose.msra.mxu0 %v1203
        %1207 = vmatprep.subr.bf16.mxu0 0
        %1208 = vmatpush1.bf16.xpose.msra.mxu0 0
        %1209 = vmatprep.subr.bf16.mxu0 0
        %1210 = vmatpush1.bf16.xpose.msra.mxu0 0
        %1211 = vmatprep.subr.bf16.mxu0 0
        %1212 = vmatpush1.bf16.xpose.msra.mxu0 0
        %1213 = vmatprep.subr.bf16.mxu0 0
        %1214 = vmatpush1.bf16.xpose.msra.mxu0 0
        %1215 = vmatprep.subr.bf16.mxu0 0
        %1216 = vmatpush1.bf16.xpose.msra.mxu0 0
        %1217 = vmatprep.subr.bf16.mxu0 0
        %1218 = vmatpush1.bf16.xpose.msra.mxu0 0
        %1219 = vmatprep.subr.bf16.mxu0 0
        %1220 = vmatpush1.bf16.xpose.msra.mxu0 0
        %1221 = vmatprep.subr.bf16.mxu0 0
        %1222 = vmatpush1.bf16.xpose.msra.mxu0 0
        %1223 = vmatprep.subr.bf16.mxu0 0
        %1224 = vmatpush1.bf16.xpose.msra.mxu0 0
        %1225 = vmatprep.subr.bf16.mxu0 0
        %1226 = vmatpush1.bf16.xpose.msra.mxu0 0
        %1227 = vmatprep.subr.bf16.mxu0 0
        %1228 = vmatpush1.bf16.xpose.msra.mxu0 0
        %1229 = vmatprep.subr.bf16.mxu0 0
        %1230 = vmatpush1.bf16.xpose.msra.mxu0 0
        %1231 = vmatprep.subr.bf16.mxu0 0
        %1232 = vmatpush1.bf16.xpose.msra.mxu0 0
        %1233 = vmatprep.subr.bf16.mxu0 0
        %1234 = vmatpush1.bf16.xpose.msra.mxu0 0
        %1235 = vmatprep.subr.bf16.mxu0 0
        %1236 = vmatpush1.bf16.xpose.msra.mxu0 0
        %1237 = vmatprep.mubr.bf16.mxu0 0
        %1238 = vmatmul.mubr.bf16.gmra.mrb[0].mxu0 %v1200
        %v1239 = vpop.f32.mrb[0].mxu0
        %v1240 = vadd.f32 0.0, %v1239
        %v1241 = vpop.f32.mrb[0].mxu0
        %v1242 = vpop.f32.mrb[0].mxu0
        %v1243 = vadd.f32 0.0, %v1242
        %v1244 = vpop.f32.mrb[0].mxu0
        %1245 = vdwg.mxu0
        %v1247 = vsel %vm1104, %v1061, 0
        %v1250 = vsel %vm1104, %v1075, 0
        %1252 = vmatprep.subr.bf16.mxu0 0
        %1253 = vmatpush1.bf16.xpose.msra.mxu0 %v1250
        %1254 = vmatprep.subr.bf16.mxu0 0
        %1255 = vmatpush1.bf16.xpose.msra.mxu0 0
        %1256 = vmatprep.subr.bf16.mxu0 0
        %1257 = vmatpush1.bf16.xpose.msra.mxu0 0
        %1258 = vmatprep.subr.bf16.mxu0 0
        %1259 = vmatpush1.bf16.xpose.msra.mxu0 0
        %1260 = vmatprep.subr.bf16.mxu0 0
        %1261 = vmatpush1.bf16.xpose.msra.mxu0 0
        %1262 = vmatprep.subr.bf16.mxu0 0
        %1263 = vmatpush1.bf16.xpose.msra.mxu0 0
        %1264 = vmatprep.subr.bf16.mxu0 0
        %1265 = vmatpush1.bf16.xpose.msra.mxu0 0
        %1266 = vmatprep.subr.bf16.mxu0 0
        %1267 = vmatpush1.bf16.xpose.msra.mxu0 0
        %1268 = vmatprep.subr.bf16.mxu0 0
        %1269 = vmatpush1.bf16.xpose.msra.mxu0 0
        %1270 = vmatprep.subr.bf16.mxu0 0
        %1271 = vmatpush1.bf16.xpose.msra.mxu0 0
        %1272 = vmatprep.subr.bf16.mxu0 0
        %1273 = vmatpush1.bf16.xpose.msra.mxu0 0
        %1274 = vmatprep.subr.bf16.mxu0 0
        %1275 = vmatpush1.bf16.xpose.msra.mxu0 0
        %1276 = vmatprep.subr.bf16.mxu0 0
        %1277 = vmatpush1.bf16.xpose.msra.mxu0 0
        %1278 = vmatprep.subr.bf16.mxu0 0
        %1279 = vmatpush1.bf16.xpose.msra.mxu0 0
        %1280 = vmatprep.subr.bf16.mxu0 0
        %1281 = vmatpush1.bf16.xpose.msra.mxu0 0
        %1282 = vmatprep.subr.bf16.mxu0 0
        %1283 = vmatpush1.bf16.xpose.msra.mxu0 0
        %1284 = vmatprep.mubr.bf16.mxu0 0
        %1285 = vmatmul.mubr.bf16.gmra.mrb[0].mxu0 %v1247
        %v1286 = vpop.f32.mrb[0].mxu0
        %v1287 = vadd.f32 0.0, %v1286
        %v1288 = vpop.f32.mrb[0].mxu0
        %v1289 = vpop.f32.mrb[0].mxu0
        %v1290 = vadd.f32 0.0, %v1289
        %v1291 = vpop.f32.mrb[0].mxu0
        %1292 = vdwg.mxu0
        %v1294 = vsel %vm1104, %v1063, 0
        %v1297 = vsel %vm1104, %v1077, 0
        %1299 = vmatprep.subr.bf16.mxu0 0
        %1300 = vmatpush1.bf16.xpose.msra.mxu0 %v1297
        %1301 = vmatprep.subr.bf16.mxu0 0
        %1302 = vmatpush1.bf16.xpose.msra.mxu0 0
        %1303 = vmatprep.subr.bf16.mxu0 0
        %1304 = vmatpush1.bf16.xpose.msra.mxu0 0
        %1305 = vmatprep.subr.bf16.mxu0 0
        %1306 = vmatpush1.bf16.xpose.msra.mxu0 0
        %1307 = vmatprep.subr.bf16.mxu0 0
        %1308 = vmatpush1.bf16.xpose.msra.mxu0 0
        %1309 = vmatprep.subr.bf16.mxu0 0
        %1310 = vmatpush1.bf16.xpose.msra.mxu0 0
        %1311 = vmatprep.subr.bf16.mxu0 0
        %1312 = vmatpush1.bf16.xpose.msra.mxu0 0
        %1313 = vmatprep.subr.bf16.mxu0 0
        %1314 = vmatpush1.bf16.xpose.msra.mxu0 0
        %1315 = vmatprep.subr.bf16.mxu0 0
        %1316 = vmatpush1.bf16.xpose.msra.mxu0 0
        %1317 = vmatprep.subr.bf16.mxu0 0
        %1318 = vmatpush1.bf16.xpose.msra.mxu0 0
        %1319 = vmatprep.subr.bf16.mxu0 0
        %1320 = vmatpush1.bf16.xpose.msra.mxu0 0
        %1321 = vmatprep.subr.bf16.mxu0 0
        %1322 = vmatpush1.bf16.xpose.msra.mxu0 0
        %1323 = vmatprep.subr.bf16.mxu0 0
        %1324 = vmatpush1.bf16.xpose.msra.mxu0 0
        %1325 = vmatprep.subr.bf16.mxu0 0
        %1326 = vmatpush1.bf16.xpose.msra.mxu0 0
        %1327 = vmatprep.subr.bf16.mxu0 0
        %1328 = vmatpush1.bf16.xpose.msra.mxu0 0
        %1329 = vmatprep.subr.bf16.mxu0 0
        %1330 = vmatpush1.bf16.xpose.msra.mxu0 0
        %1331 = vmatprep.mubr.bf16.mxu0 0
        %1332 = vmatmul.mubr.bf16.gmra.mrb[0].mxu0 %v1294
        %v1333 = vpop.f32.mrb[0].mxu0
        %v1334 = vadd.f32 0.0, %v1333
        %v1335 = vpop.f32.mrb[0].mxu0
        %v1336 = vpop.f32.mrb[0].mxu0
        %v1337 = vadd.f32 0.0, %v1336
        %v1338 = vpop.f32.mrb[0].mxu0
        %1339 = vdwg.mxu0
        %v1341 = vsel %vm1104, %v1065, 0
        %v1344 = vsel %vm1104, %v1079, 0
        %1346 = vmatprep.subr.bf16.mxu0 0
        %1347 = vmatpush1.bf16.xpose.msra.mxu0 %v1344
        %1348 = vmatprep.subr.bf16.mxu0 0
        %1349 = vmatpush1.bf16.xpose.msra.mxu0 0
        %1350 = vmatprep.subr.bf16.mxu0 0
        %1351 = vmatpush1.bf16.xpose.msra.mxu0 0
        %1352 = vmatprep.subr.bf16.mxu0 0
        %1353 = vmatpush1.bf16.xpose.msra.mxu0 0
        %1354 = vmatprep.subr.bf16.mxu0 0
        %1355 = vmatpush1.bf16.xpose.msra.mxu0 0
        %1356 = vmatprep.subr.bf16.mxu0 0
        %1357 = vmatpush1.bf16.xpose.msra.mxu0 0
        %1358 = vmatprep.subr.bf16.mxu0 0
        %1359 = vmatpush1.bf16.xpose.msra.mxu0 0
        %1360 = vmatprep.subr.bf16.mxu0 0
        %1361 = vmatpush1.bf16.xpose.msra.mxu0 0
        %1362 = vmatprep.subr.bf16.mxu0 0
        %1363 = vmatpush1.bf16.xpose.msra.mxu0 0
        %1364 = vmatprep.subr.bf16.mxu0 0
        %1365 = vmatpush1.bf16.xpose.msra.mxu0 0
        %1366 = vmatprep.subr.bf16.mxu0 0
        %1367 = vmatpush1.bf16.xpose.msra.mxu0 0
        %1368 = vmatprep.subr.bf16.mxu0 0
        %1369 = vmatpush1.bf16.xpose.msra.mxu0 0
        %1370 = vmatprep.subr.bf16.mxu0 0
        %1371 = vmatpush1.bf16.xpose.msra.mxu0 0
        %1372 = vmatprep.subr.bf16.mxu0 0
        %1373 = vmatpush1.bf16.xpose.msra.mxu0 0
        %1374 = vmatprep.subr.bf16.mxu0 0
        %1375 = vmatpush1.bf16.xpose.msra.mxu0 0
        %1376 = vmatprep.subr.bf16.mxu0 0
        %1377 = vmatpush1.bf16.xpose.msra.mxu0 0
        %1378 = vmatprep.mubr.bf16.mxu0 0
        %1379 = vmatmul.mubr.bf16.gmra.mrb[0].mxu0 %v1341
        %v1380 = vpop.f32.mrb[0].mxu0
        %v1381 = vadd.f32 0.0, %v1380
        %v1382 = vpop.f32.mrb[0].mxu0
        %v1383 = vpop.f32.mrb[0].mxu0
        %v1384 = vadd.f32 0.0, %v1383
        %v1385 = vpop.f32.mrb[0].mxu0
        %1386 = vdwg.mxu0
        %v1388 = vsel %vm1104, %v1067, 0
        %v1391 = vsel %vm1104, %v1081, 0
        %1393 = vmatprep.subr.bf16.mxu0 0
        %1394 = vmatpush1.bf16.xpose.msra.mxu0 %v1391
        %1395 = vmatprep.subr.bf16.mxu0 0
        %1396 = vmatpush1.bf16.xpose.msra.mxu0 0
        %1397 = vmatprep.subr.bf16.mxu0 0
        %1398 = vmatpush1.bf16.xpose.msra.mxu0 0
        %1399 = vmatprep.subr.bf16.mxu0 0
        %1400 = vmatpush1.bf16.xpose.msra.mxu0 0
        %1401 = vmatprep.subr.bf16.mxu0 0
        %1402 = vmatpush1.bf16.xpose.msra.mxu0 0
        %1403 = vmatprep.subr.bf16.mxu0 0
        %1404 = vmatpush1.bf16.xpose.msra.mxu0 0
        %1405 = vmatprep.subr.bf16.mxu0 0
        %1406 = vmatpush1.bf16.xpose.msra.mxu0 0
        %1407 = vmatprep.subr.bf16.mxu0 0
        %1408 = vmatpush1.bf16.xpose.msra.mxu0 0
        %1409 = vmatprep.subr.bf16.mxu0 0
        %1410 = vmatpush1.bf16.xpose.msra.mxu0 0
        %1411 = vmatprep.subr.bf16.mxu0 0
        %1412 = vmatpush1.bf16.xpose.msra.mxu0 0
        %1413 = vmatprep.subr.bf16.mxu0 0
        %1414 = vmatpush1.bf16.xpose.msra.mxu0 0
        %1415 = vmatprep.subr.bf16.mxu0 0
        %1416 = vmatpush1.bf16.xpose.msra.mxu0 0
        %1417 = vmatprep.subr.bf16.mxu0 0
        %1418 = vmatpush1.bf16.xpose.msra.mxu0 0
        %1419 = vmatprep.subr.bf16.mxu0 0
        %1420 = vmatpush1.bf16.xpose.msra.mxu0 0
        %1421 = vmatprep.subr.bf16.mxu0 0
        %1422 = vmatpush1.bf16.xpose.msra.mxu0 0
        %1423 = vmatprep.subr.bf16.mxu0 0
        %1424 = vmatpush1.bf16.xpose.msra.mxu0 0
        %1425 = vmatprep.mubr.bf16.mxu0 0
        %1426 = vmatmul.mubr.bf16.gmra.mrb[0].mxu0 %v1388
        %v1427 = vpop.f32.mrb[0].mxu0
        %v1428 = vadd.f32 0.0, %v1427
        %v1429 = vpop.f32.mrb[0].mxu0
        %v1430 = vpop.f32.mrb[0].mxu0
        %v1431 = vadd.f32 0.0, %v1430
        %v1432 = vpop.f32.mrb[0].mxu0
        %1433 = vdwg.mxu0
        %v1435 = vsel %vm1104, %v1069, 0
        %v1438 = vsel %vm1104, %v1083, 0
        %1440 = vmatprep.subr.bf16.mxu0 0
        %1441 = vmatpush1.bf16.xpose.msra.mxu0 %v1438
        %1442 = vmatprep.subr.bf16.mxu0 0
        %1443 = vmatpush1.bf16.xpose.msra.mxu0 0
        %1444 = vmatprep.subr.bf16.mxu0 0
        %1445 = vmatpush1.bf16.xpose.msra.mxu0 0
        %1446 = vmatprep.subr.bf16.mxu0 0
        %1447 = vmatpush1.bf16.xpose.msra.mxu0 0
        %1448 = vmatprep.subr.bf16.mxu0 0
        %1449 = vmatpush1.bf16.xpose.msra.mxu0 0
        %1450 = vmatprep.subr.bf16.mxu0 0
        %1451 = vmatpush1.bf16.xpose.msra.mxu0 0
        %1452 = vmatprep.subr.bf16.mxu0 0
        %1453 = vmatpush1.bf16.xpose.msra.mxu0 0
        %1454 = vmatprep.subr.bf16.mxu0 0
        %1455 = vmatpush1.bf16.xpose.msra.mxu0 0
        %1456 = vmatprep.subr.bf16.mxu0 0
        %1457 = vmatpush1.bf16.xpose.msra.mxu0 0
        %1458 = vmatprep.subr.bf16.mxu0 0
        %1459 = vmatpush1.bf16.xpose.msra.mxu0 0
        %1460 = vmatprep.subr.bf16.mxu0 0
        %1461 = vmatpush1.bf16.xpose.msra.mxu0 0
        %1462 = vmatprep.subr.bf16.mxu0 0
        %1463 = vmatpush1.bf16.xpose.msra.mxu0 0
        %1464 = vmatprep.subr.bf16.mxu0 0
        %1465 = vmatpush1.bf16.xpose.msra.mxu0 0
        %1466 = vmatprep.subr.bf16.mxu0 0
        %1467 = vmatpush1.bf16.xpose.msra.mxu0 0
        %1468 = vmatprep.subr.bf16.mxu0 0
        %1469 = vmatpush1.bf16.xpose.msra.mxu0 0
        %1470 = vmatprep.subr.bf16.mxu0 0
        %1471 = vmatpush1.bf16.xpose.msra.mxu0 0
        %1472 = vmatprep.mubr.bf16.mxu0 0
        %1473 = vmatmul.mubr.bf16.gmra.mrb[0].mxu0 %v1435
        %v1474 = vpop.f32.mrb[0].mxu0
        %v1475 = vadd.f32 0.0, %v1474
        %v1476 = vpop.f32.mrb[0].mxu0
        %v1477 = vpop.f32.mrb[0].mxu0
        %v1478 = vadd.f32 0.0, %v1477
        %v1479 = vpop.f32.mrb[0].mxu0
        %1480 = vdwg.mxu0
        %vm1481 = vcmask 130048
        %v1482 = vsel %vm1481, %v1146, -inf
        %1483 = vmax.xlane.f32.xlu0 %v1482
        %v1484 = vpop.xlane.xlu0 %1483
        %v1485 = vsel %vm1481, %v1149, -inf
        %1486 = vmax.xlane.f32.xlu0 %v1485
        %v1487 = vpop.xlane.xlu0 %1486
        %v1488 = vsel %vm1481, %v1193, -inf
        %1489 = vmax.xlane.f32.xlu0 %v1488
        %v1490 = vpop.xlane.xlu0 %1489
        %v1491 = vsel %vm1481, %v1196, -inf
        %1492 = vmax.xlane.f32.xlu0 %v1491
        %v1493 = vpop.xlane.xlu0 %1492
        %v1494 = vsel %vm1481, %v1240, -inf
        %1495 = vmax.xlane.f32.xlu0 %v1494
        %v1496 = vpop.xlane.xlu0 %1495
        %v1497 = vsel %vm1481, %v1243, -inf
        %1498 = vmax.xlane.f32.xlu0 %v1497
        %v1499 = vpop.xlane.xlu0 %1498
        %v1500 = vsel %vm1481, %v1287, -inf
        %1501 = vmax.xlane.f32.xlu0 %v1500
        %v1502 = vpop.xlane.xlu0 %1501
        %v1503 = vsel %vm1481, %v1290, -inf
        %1504 = vmax.xlane.f32.xlu0 %v1503
        %v1505 = vpop.xlane.xlu0 %1504
        %v1506 = vsel %vm1481, %v1334, -inf
        %1507 = vmax.xlane.f32.xlu0 %v1506
        %v1508 = vpop.xlane.xlu0 %1507
        %v1509 = vsel %vm1481, %v1337, -inf
        %1510 = vmax.xlane.f32.xlu0 %v1509
        %v1511 = vpop.xlane.xlu0 %1510
        %v1512 = vsel %vm1481, %v1381, -inf
        %1513 = vmax.xlane.f32.xlu0 %v1512
        %v1514 = vpop.xlane.xlu0 %1513
        %v1515 = vsel %vm1481, %v1384, -inf
        %1516 = vmax.xlane.f32.xlu0 %v1515
        %v1517 = vpop.xlane.xlu0 %1516
        %v1518 = vsel %vm1481, %v1428, -inf
        %1519 = vmax.xlane.f32.xlu0 %v1518
        %v1520 = vpop.xlane.xlu0 %1519
        %v1521 = vsel %vm1481, %v1431, -inf
        %1522 = vmax.xlane.f32.xlu0 %v1521
        %v1523 = vpop.xlane.xlu0 %1522
        %v1524 = vsel %vm1481, %v1475, -inf
        %1525 = vmax.xlane.f32.xlu0 %v1524
        %v1526 = vpop.xlane.xlu0 %1525
        %v1527 = vsel %vm1481, %v1478, -inf
        %1528 = vmax.xlane.f32.xlu0 %v1527
        %v1529 = vpop.xlane.xlu0 %1528
        %v1530 = vsub.f32 %v1146, %v1484
        %v1531 = vsub.f32 %v1149, %v1487
        %v1532 = vsub.f32 %v1193, %v1490
        %v1533 = vsub.f32 %v1196, %v1493
        %v1534 = vsub.f32 %v1240, %v1496
        %v1535 = vsub.f32 %v1243, %v1499
        %v1536 = vsub.f32 %v1287, %v1502
        %v1537 = vsub.f32 %v1290, %v1505
        %v1538 = vsub.f32 %v1334, %v1508
        %v1539 = vsub.f32 %v1337, %v1511
        %v1540 = vsub.f32 %v1381, %v1514
        %v1541 = vsub.f32 %v1384, %v1517
        %v1542 = vsub.f32 %v1428, %v1520
        %v1543 = vsub.f32 %v1431, %v1523
        %v1544 = vsub.f32 %v1475, %v1526
        %v1545 = vsub.f32 %v1478, %v1529
        %v1546 = vmul.f32 %v1530, 1.442695
        %v1547 = vpow.pop %v1546
        %v1548 = vmul.f32 %v1531, 1.442695
        %v1549 = vpow.pop %v1548
        %v1550 = vmul.f32 %v1532, 1.442695
        %v1551 = vpow.pop %v1550
        %v1552 = vmul.f32 %v1533, 1.442695
        %v1553 = vpow.pop %v1552
        %v1554 = vmul.f32 %v1534, 1.442695
        %v1555 = vpow.pop %v1554
        %v1556 = vmul.f32 %v1535, 1.442695
        %v1557 = vpow.pop %v1556
        %v1558 = vmul.f32 %v1536, 1.442695
        %v1559 = vpow.pop %v1558
        %v1560 = vmul.f32 %v1537, 1.442695
        %v1561 = vpow.pop %v1560
        %v1562 = vmul.f32 %v1538, 1.442695
        %v1563 = vpow.pop %v1562
        %v1564 = vmul.f32 %v1539, 1.442695
        %v1565 = vpow.pop %v1564
        %v1566 = vmul.f32 %v1540, 1.442695
        %v1567 = vpow.pop %v1566
        %v1568 = vmul.f32 %v1541, 1.442695
        %v1569 = vpow.pop %v1568
        %v1570 = vmul.f32 %v1542, 1.442695
        %v1571 = vpow.pop %v1570
        %v1572 = vmul.f32 %v1543, 1.442695
        %v1573 = vpow.pop %v1572
        %v1574 = vmul.f32 %v1544, 1.442695
        %v1575 = vpow.pop %v1574
        %v1576 = vmul.f32 %v1545, 1.442695
        %v1577 = vpow.pop %v1576
        %v1578 = vsel %vm1481, %v1547, 0.0
        %1579 = vadd.xlane.f32.xlu0 %v1578
        %v1580 = vpop.xlane.xlu0 %1579
        %v1581 = vsel %vm1481, %v1549, 0.0
        %1582 = vadd.xlane.f32.xlu0 %v1581
        %v1583 = vpop.xlane.xlu0 %1582
        %v1584 = vsel %vm1481, %v1551, 0.0
        %1585 = vadd.xlane.f32.xlu0 %v1584
        %v1586 = vpop.xlane.xlu0 %1585
        %v1587 = vsel %vm1481, %v1553, 0.0
        %1588 = vadd.xlane.f32.xlu0 %v1587
        %v1589 = vpop.xlane.xlu0 %1588
        %v1590 = vsel %vm1481, %v1555, 0.0
        %1591 = vadd.xlane.f32.xlu0 %v1590
        %v1592 = vpop.xlane.xlu0 %1591
        %v1593 = vsel %vm1481, %v1557, 0.0
        %1594 = vadd.xlane.f32.xlu0 %v1593
        %v1595 = vpop.xlane.xlu0 %1594
        %v1596 = vsel %vm1481, %v1559, 0.0
        %1597 = vadd.xlane.f32.xlu0 %v1596
        %v1598 = vpop.xlane.xlu0 %1597
        %v1599 = vsel %vm1481, %v1561, 0.0
        %1600 = vadd.xlane.f32.xlu0 %v1599
        %v1601 = vpop.xlane.xlu0 %1600
        %v1602 = vsel %vm1481, %v1563, 0.0
        %1603 = vadd.xlane.f32.xlu0 %v1602
        %v1604 = vpop.xlane.xlu0 %1603
        %v1605 = vsel %vm1481, %v1565, 0.0
        %1606 = vadd.xlane.f32.xlu0 %v1605
        %v1607 = vpop.xlane.xlu0 %1606
        %v1608 = vsel %vm1481, %v1567, 0.0
        %1609 = vadd.xlane.f32.xlu0 %v1608
        %v1610 = vpop.xlane.xlu0 %1609
        %v1611 = vsel %vm1481, %v1569, 0.0
        %1612 = vadd.xlane.f32.xlu0 %v1611
        %v1613 = vpop.xlane.xlu0 %1612
        %v1614 = vsel %vm1481, %v1571, 0.0
        %1615 = vadd.xlane.f32.xlu0 %v1614
        %v1616 = vpop.xlane.xlu0 %1615
        %v1617 = vsel %vm1481, %v1573, 0.0
        %1618 = vadd.xlane.f32.xlu0 %v1617
        %v1619 = vpop.xlane.xlu0 %1618
        %v1620 = vsel %vm1481, %v1575, 0.0
        %1621 = vadd.xlane.f32.xlu0 %v1620
        %v1622 = vpop.xlane.xlu0 %1621
        %v1623 = vsel %vm1481, %v1577, 0.0
        %1624 = vadd.xlane.f32.xlu0 %v1623
        %v1625 = vpop.xlane.xlu0 %1624
        %v1626 = vrcp.pop %v1580
        %v1627 = vrcp.pop %v1583
        %v1628 = vrcp.pop %v1586
        %v1629 = vrcp.pop %v1589
        %v1630 = vrcp.pop %v1592
        %v1631 = vrcp.pop %v1595
        %v1632 = vrcp.pop %v1598
        %v1633 = vrcp.pop %v1601
        %v1634 = vrcp.pop %v1604
        %v1635 = vrcp.pop %v1607
        %v1636 = vrcp.pop %v1610
        %v1637 = vrcp.pop %v1613
        %v1638 = vrcp.pop %v1616
        %v1639 = vrcp.pop %v1619
        %v1640 = vrcp.pop %v1622
        %v1641 = vrcp.pop %v1625
        %v1642 = vmul.f32 %v1547, %v1626
        %v1643 = vmul.f32 %v1549, %v1627
        %v1644 = vmul.f32 %v1551, %v1628
        %v1645 = vmul.f32 %v1553, %v1629
        %v1646 = vmul.f32 %v1555, %v1630
        %v1647 = vmul.f32 %v1557, %v1631
        %v1648 = vmul.f32 %v1559, %v1632
        %v1649 = vmul.f32 %v1561, %v1633
        %v1650 = vmul.f32 %v1563, %v1634
        %v1651 = vmul.f32 %v1565, %v1635
        %v1652 = vmul.f32 %v1567, %v1636
        %v1653 = vmul.f32 %v1569, %v1637
        %v1654 = vmul.f32 %v1571, %v1638
        %v1655 = vmul.f32 %v1573, %v1639
        %v1656 = vmul.f32 %v1575, %v1640
        %v1657 = vmul.f32 %v1577, %v1641
        %v1658 = vpack.c.bf16 %v1643, %v1642
        %v1659 = vpack.c.bf16 %v1645, %v1644
        %v1660 = vpack.c.bf16 %v1647, %v1646
        %v1661 = vpack.c.bf16 %v1649, %v1648
        %v1662 = vpack.c.bf16 %v1651, %v1650
        %v1663 = vpack.c.bf16 %v1653, %v1652
        %v1664 = vpack.c.bf16 %v1655, %v1654
        %v1665 = vpack.c.bf16 %v1657, %v1656
        %v1667 = vsel %vm1481, %v1658, 0
        %1669 = vmatprep.subr.bf16.mxu0 0
        %1670 = vmatpush1.bf16.msra.mxu0 %v1054
        %1671 = vmatprep.subr.bf16.mxu0 0
        %1672 = vmatpush1.bf16.msra.mxu0 0
        %1673 = vmatprep.subr.bf16.mxu0 0
        %1674 = vmatpush1.bf16.msra.mxu0 0
        %1675 = vmatprep.subr.bf16.mxu0 0
        %1676 = vmatpush1.bf16.msra.mxu0 0
        %1677 = vmatprep.subr.bf16.mxu0 0
        %1678 = vmatpush1.bf16.msra.mxu0 0
        %1679 = vmatprep.subr.bf16.mxu0 0
        %1680 = vmatpush1.bf16.msra.mxu0 0
        %1681 = vmatprep.subr.bf16.mxu0 0
        %1682 = vmatpush1.bf16.msra.mxu0 0
        %1683 = vmatprep.subr.bf16.mxu0 0
        %1684 = vmatpush1.bf16.msra.mxu0 0
        %1685 = vmatprep.subr.bf16.mxu0 0
        %1686 = vmatpush1.bf16.msra.mxu0 0
        %1687 = vmatprep.subr.bf16.mxu0 0
        %1688 = vmatpush1.bf16.msra.mxu0 0
        %1689 = vmatprep.subr.bf16.mxu0 0
        %1690 = vmatpush1.bf16.msra.mxu0 0
        %1691 = vmatprep.subr.bf16.mxu0 0
        %1692 = vmatpush1.bf16.msra.mxu0 0
        %1693 = vmatprep.subr.bf16.mxu0 0
        %1694 = vmatpush1.bf16.msra.mxu0 0
        %1695 = vmatprep.subr.bf16.mxu0 0
        %1696 = vmatpush1.bf16.msra.mxu0 0
        %1697 = vmatprep.subr.bf16.mxu0 0
        %1698 = vmatpush1.bf16.msra.mxu0 0
        %1699 = vmatprep.subr.bf16.mxu0 0
        %1700 = vmatpush1.bf16.msra.mxu0 0
        %1701 = vmatprep.mubr.bf16.mxu0 0
        %1702 = vmatmul.mubr.bf16.gmra.mrb[0].mxu0 %v1667
        %v1703 = vpop.f32.mrb[0].mxu0
        %v1704 = vadd.f32 0.0, %v1703
        %v1705 = vpop.f32.mrb[0].mxu0
        %v1706 = vpop.f32.mrb[0].mxu0
        %v1707 = vadd.f32 0.0, %v1706
        %v1708 = vpop.f32.mrb[0].mxu0
        %1709 = vdwg.mxu0
        %v1711 = vsel %vm1481, %v1659, 0
        %1713 = vmatprep.subr.bf16.mxu0 0
        %1714 = vmatpush1.bf16.msra.mxu0 %v1055
        %1715 = vmatprep.subr.bf16.mxu0 0
        %1716 = vmatpush1.bf16.msra.mxu0 0
        %1717 = vmatprep.subr.bf16.mxu0 0
        %1718 = vmatpush1.bf16.msra.mxu0 0
        %1719 = vmatprep.subr.bf16.mxu0 0
        %1720 = vmatpush1.bf16.msra.mxu0 0
        %1721 = vmatprep.subr.bf16.mxu0 0
        %1722 = vmatpush1.bf16.msra.mxu0 0
        %1723 = vmatprep.subr.bf16.mxu0 0
        %1724 = vmatpush1.bf16.msra.mxu0 0
        %1725 = vmatprep.subr.bf16.mxu0 0
        %1726 = vmatpush1.bf16.msra.mxu0 0
        %1727 = vmatprep.subr.bf16.mxu0 0
        %1728 = vmatpush1.bf16.msra.mxu0 0
        %1729 = vmatprep.subr.bf16.mxu0 0
        %1730 = vmatpush1.bf16.msra.mxu0 0
        %1731 = vmatprep.subr.bf16.mxu0 0
        %1732 = vmatpush1.bf16.msra.mxu0 0
        %1733 = vmatprep.subr.bf16.mxu0 0
        %1734 = vmatpush1.bf16.msra.mxu0 0
        %1735 = vmatprep.subr.bf16.mxu0 0
        %1736 = vmatpush1.bf16.msra.mxu0 0
        %1737 = vmatprep.subr.bf16.mxu0 0
        %1738 = vmatpush1.bf16.msra.mxu0 0
        %1739 = vmatprep.subr.bf16.mxu0 0
        %1740 = vmatpush1.bf16.msra.mxu0 0
        %1741 = vmatprep.subr.bf16.mxu0 0
        %1742 = vmatpush1.bf16.msra.mxu0 0
        %1743 = vmatprep.subr.bf16.mxu0 0
        %1744 = vmatpush1.bf16.msra.mxu0 0
        %1745 = vmatprep.mubr.bf16.mxu0 0
        %1746 = vmatmul.mubr.bf16.gmra.mrb[0].mxu0 %v1711
        %v1747 = vpop.f32.mrb[0].mxu0
        %v1748 = vadd.f32 0.0, %v1747
        %v1749 = vpop.f32.mrb[0].mxu0
        %v1750 = vpop.f32.mrb[0].mxu0
        %v1751 = vadd.f32 0.0, %v1750
        %v1752 = vpop.f32.mrb[0].mxu0
        %1753 = vdwg.mxu0
        %v1755 = vsel %vm1481, %v1660, 0
        %1757 = vmatprep.subr.bf16.mxu0 0
        %1758 = vmatpush1.bf16.msra.mxu0 %v1087
        %1759 = vmatprep.subr.bf16.mxu0 0
        %1760 = vmatpush1.bf16.msra.mxu0 0
        %1761 = vmatprep.subr.bf16.mxu0 0
        %1762 = vmatpush1.bf16.msra.mxu0 0
        %1763 = vmatprep.subr.bf16.mxu0 0
        %1764 = vmatpush1.bf16.msra.mxu0 0
        %1765 = vmatprep.subr.bf16.mxu0 0
        %1766 = vmatpush1.bf16.msra.mxu0 0
        %1767 = vmatprep.subr.bf16.mxu0 0
        %1768 = vmatpush1.bf16.msra.mxu0 0
        %1769 = vmatprep.subr.bf16.mxu0 0
        %1770 = vmatpush1.bf16.msra.mxu0 0
        %1771 = vmatprep.subr.bf16.mxu0 0
        %1772 = vmatpush1.bf16.msra.mxu0 0
        %1773 = vmatprep.subr.bf16.mxu0 0
        %1774 = vmatpush1.bf16.msra.mxu0 0
        %1775 = vmatprep.subr.bf16.mxu0 0
        %1776 = vmatpush1.bf16.msra.mxu0 0
        %1777 = vmatprep.subr.bf16.mxu0 0
        %1778 = vmatpush1.bf16.msra.mxu0 0
        %1779 = vmatprep.subr.bf16.mxu0 0
        %1780 = vmatpush1.bf16.msra.mxu0 0
        %1781 = vmatprep.subr.bf16.mxu0 0
        %1782 = vmatpush1.bf16.msra.mxu0 0
        %1783 = vmatprep.subr.bf16.mxu0 0
        %1784 = vmatpush1.bf16.msra.mxu0 0
        %1785 = vmatprep.subr.bf16.mxu0 0
        %1786 = vmatpush1.bf16.msra.mxu0 0
        %1787 = vmatprep.subr.bf16.mxu0 0
        %1788 = vmatpush1.bf16.msra.mxu0 0
        %1789 = vmatprep.mubr.bf16.mxu0 0
        %1790 = vmatmul.mubr.bf16.gmra.mrb[0].mxu0 %v1755
        %v1791 = vpop.f32.mrb[0].mxu0
        %v1792 = vadd.f32 0.0, %v1791
        %v1793 = vpop.f32.mrb[0].mxu0
        %v1794 = vpop.f32.mrb[0].mxu0
        %v1795 = vadd.f32 0.0, %v1794
        %v1796 = vpop.f32.mrb[0].mxu0
        %1797 = vdwg.mxu0
        %v1799 = vsel %vm1481, %v1661, 0
        %1801 = vmatprep.subr.bf16.mxu0 0
        %1802 = vmatpush1.bf16.msra.mxu0 %v1089
        %1803 = vmatprep.subr.bf16.mxu0 0
        %1804 = vmatpush1.bf16.msra.mxu0 0
        %1805 = vmatprep.subr.bf16.mxu0 0
        %1806 = vmatpush1.bf16.msra.mxu0 0
        %1807 = vmatprep.subr.bf16.mxu0 0
        %1808 = vmatpush1.bf16.msra.mxu0 0
        %1809 = vmatprep.subr.bf16.mxu0 0
        %1810 = vmatpush1.bf16.msra.mxu0 0
        %1811 = vmatprep.subr.bf16.mxu0 0
        %1812 = vmatpush1.bf16.msra.mxu0 0
        %1813 = vmatprep.subr.bf16.mxu0 0
        %1814 = vmatpush1.bf16.msra.mxu0 0
        %1815 = vmatprep.subr.bf16.mxu0 0
        %1816 = vmatpush1.bf16.msra.mxu0 0
        %1817 = vmatprep.subr.bf16.mxu0 0
        %1818 = vmatpush1.bf16.msra.mxu0 0
        %1819 = vmatprep.subr.bf16.mxu0 0
        %1820 = vmatpush1.bf16.msra.mxu0 0
        %1821 = vmatprep.subr.bf16.mxu0 0
        %1822 = vmatpush1.bf16.msra.mxu0 0
        %1823 = vmatprep.subr.bf16.mxu0 0
        %1824 = vmatpush1.bf16.msra.mxu0 0
        %1825 = vmatprep.subr.bf16.mxu0 0
        %1826 = vmatpush1.bf16.msra.mxu0 0
        %1827 = vmatprep.subr.bf16.mxu0 0
        %1828 = vmatpush1.bf16.msra.mxu0 0
        %1829 = vmatprep.subr.bf16.mxu0 0
        %1830 = vmatpush1.bf16.msra.mxu0 0
        %1831 = vmatprep.subr.bf16.mxu0 0
        %1832 = vmatpush1.bf16.msra.mxu0 0
        %1833 = vmatprep.mubr.bf16.mxu0 0
        %1834 = vmatmul.mubr.bf16.gmra.mrb[0].mxu0 %v1799
        %v1835 = vpop.f32.mrb[0].mxu0
        %v1836 = vadd.f32 0.0, %v1835
        %v1837 = vpop.f32.mrb[0].mxu0
        %v1838 = vpop.f32.mrb[0].mxu0
        %v1839 = vadd.f32 0.0, %v1838
        %v1840 = vpop.f32.mrb[0].mxu0
        %1841 = vdwg.mxu0
        %v1843 = vsel %vm1481, %v1662, 0
        %1845 = vmatprep.subr.bf16.mxu0 0
        %1846 = vmatpush1.bf16.msra.mxu0 %v1093
        %1847 = vmatprep.subr.bf16.mxu0 0
        %1848 = vmatpush1.bf16.msra.mxu0 0
        %1849 = vmatprep.subr.bf16.mxu0 0
        %1850 = vmatpush1.bf16.msra.mxu0 0
        %1851 = vmatprep.subr.bf16.mxu0 0
        %1852 = vmatpush1.bf16.msra.mxu0 0
        %1853 = vmatprep.subr.bf16.mxu0 0
        %1854 = vmatpush1.bf16.msra.mxu0 0
        %1855 = vmatprep.subr.bf16.mxu0 0
        %1856 = vmatpush1.bf16.msra.mxu0 0
        %1857 = vmatprep.subr.bf16.mxu0 0
        %1858 = vmatpush1.bf16.msra.mxu0 0
        %1859 = vmatprep.subr.bf16.mxu0 0
        %1860 = vmatpush1.bf16.msra.mxu0 0
        %1861 = vmatprep.subr.bf16.mxu0 0
        %1862 = vmatpush1.bf16.msra.mxu0 0
        %1863 = vmatprep.subr.bf16.mxu0 0
        %1864 = vmatpush1.bf16.msra.mxu0 0
        %1865 = vmatprep.subr.bf16.mxu0 0
        %1866 = vmatpush1.bf16.msra.mxu0 0
        %1867 = vmatprep.subr.bf16.mxu0 0
        %1868 = vmatpush1.bf16.msra.mxu0 0
        %1869 = vmatprep.subr.bf16.mxu0 0
        %1870 = vmatpush1.bf16.msra.mxu0 0
        %1871 = vmatprep.subr.bf16.mxu0 0
        %1872 = vmatpush1.bf16.msra.mxu0 0
        %1873 = vmatprep.subr.bf16.mxu0 0
        %1874 = vmatpush1.bf16.msra.mxu0 0
        %1875 = vmatprep.subr.bf16.mxu0 0
        %1876 = vmatpush1.bf16.msra.mxu0 0
        %1877 = vmatprep.mubr.bf16.mxu0 0
        %1878 = vmatmul.mubr.bf16.gmra.mrb[0].mxu0 %v1843
        %v1879 = vpop.f32.mrb[0].mxu0
        %v1880 = vadd.f32 0.0, %v1879
        %v1881 = vpop.f32.mrb[0].mxu0
        %v1882 = vpop.f32.mrb[0].mxu0
        %v1883 = vadd.f32 0.0, %v1882
        %v1884 = vpop.f32.mrb[0].mxu0
        %1885 = vdwg.mxu0
        %v1887 = vsel %vm1481, %v1663, 0
        %1889 = vmatprep.subr.bf16.mxu0 0
        %1890 = vmatpush1.bf16.msra.mxu0 %v1095
        %1891 = vmatprep.subr.bf16.mxu0 0
        %1892 = vmatpush1.bf16.msra.mxu0 0
        %1893 = vmatprep.subr.bf16.mxu0 0
        %1894 = vmatpush1.bf16.msra.mxu0 0
        %1895 = vmatprep.subr.bf16.mxu0 0
        %1896 = vmatpush1.bf16.msra.mxu0 0
        %1897 = vmatprep.subr.bf16.mxu0 0
        %1898 = vmatpush1.bf16.msra.mxu0 0
        %1899 = vmatprep.subr.bf16.mxu0 0
        %1900 = vmatpush1.bf16.msra.mxu0 0
        %1901 = vmatprep.subr.bf16.mxu0 0
        %1902 = vmatpush1.bf16.msra.mxu0 0
        %1903 = vmatprep.subr.bf16.mxu0 0
        %1904 = vmatpush1.bf16.msra.mxu0 0
        %1905 = vmatprep.subr.bf16.mxu0 0
        %1906 = vmatpush1.bf16.msra.mxu0 0
        %1907 = vmatprep.subr.bf16.mxu0 0
        %1908 = vmatpush1.bf16.msra.mxu0 0
        %1909 = vmatprep.subr.bf16.mxu0 0
        %1910 = vmatpush1.bf16.msra.mxu0 0
        %1911 = vmatprep.subr.bf16.mxu0 0
        %1912 = vmatpush1.bf16.msra.mxu0 0
        %1913 = vmatprep.subr.bf16.mxu0 0
        %1914 = vmatpush1.bf16.msra.mxu0 0
        %1915 = vmatprep.subr.bf16.mxu0 0
        %1916 = vmatpush1.bf16.msra.mxu0 0
        %1917 = vmatprep.subr.bf16.mxu0 0
        %1918 = vmatpush1.bf16.msra.mxu0 0
        %1919 = vmatprep.subr.bf16.mxu0 0
        %1920 = vmatpush1.bf16.msra.mxu0 0
        %1921 = vmatprep.mubr.bf16.mxu0 0
        %1922 = vmatmul.mubr.bf16.gmra.mrb[0].mxu0 %v1887
        %v1923 = vpop.f32.mrb[0].mxu0
        %v1924 = vadd.f32 0.0, %v1923
        %v1925 = vpop.f32.mrb[0].mxu0
        %v1926 = vpop.f32.mrb[0].mxu0
        %v1927 = vadd.f32 0.0, %v1926
        %v1928 = vpop.f32.mrb[0].mxu0
        %1929 = vdwg.mxu0
        %v1931 = vsel %vm1481, %v1664, 0
        %1933 = vmatprep.subr.bf16.mxu0 0
        %1934 = vmatpush1.bf16.msra.mxu0 %v1099
        %1935 = vmatprep.subr.bf16.mxu0 0
        %1936 = vmatpush1.bf16.msra.mxu0 0
        %1937 = vmatprep.subr.bf16.mxu0 0
        %1938 = vmatpush1.bf16.msra.mxu0 0
        %1939 = vmatprep.subr.bf16.mxu0 0
        %1940 = vmatpush1.bf16.msra.mxu0 0
        %1941 = vmatprep.subr.bf16.mxu0 0
        %1942 = vmatpush1.bf16.msra.mxu0 0
        %1943 = vmatprep.subr.bf16.mxu0 0
        %1944 = vmatpush1.bf16.msra.mxu0 0
        %1945 = vmatprep.subr.bf16.mxu0 0
        %1946 = vmatpush1.bf16.msra.mxu0 0
        %1947 = vmatprep.subr.bf16.mxu0 0
        %1948 = vmatpush1.bf16.msra.mxu0 0
        %1949 = vmatprep.subr.bf16.mxu0 0
        %1950 = vmatpush1.bf16.msra.mxu0 0
        %1951 = vmatprep.subr.bf16.mxu0 0
        %1952 = vmatpush1.bf16.msra.mxu0 0
        %1953 = vmatprep.subr.bf16.mxu0 0
        %1954 = vmatpush1.bf16.msra.mxu0 0
        %1955 = vmatprep.subr.bf16.mxu0 0
        %1956 = vmatpush1.bf16.msra.mxu0 0
        %1957 = vmatprep.subr.bf16.mxu0 0
        %1958 = vmatpush1.bf16.msra.mxu0 0
        %1959 = vmatprep.subr.bf16.mxu0 0
        %1960 = vmatpush1.bf16.msra.mxu0 0
        %1961 = vmatprep.subr.bf16.mxu0 0
        %1962 = vmatpush1.bf16.msra.mxu0 0
        %1963 = vmatprep.subr.bf16.mxu0 0
        %1964 = vmatpush1.bf16.msra.mxu0 0
        %1965 = vmatprep.mubr.bf16.mxu0 0
        %1966 = vmatmul.mubr.bf16.gmra.mrb[0].mxu0 %v1931
        %v1967 = vpop.f32.mrb[0].mxu0
        %v1968 = vadd.f32 0.0, %v1967
        %v1969 = vpop.f32.mrb[0].mxu0
        %v1970 = vpop.f32.mrb[0].mxu0
        %v1971 = vadd.f32 0.0, %v1970
        %v1972 = vpop.f32.mrb[0].mxu0
        %1973 = vdwg.mxu0
        %v1975 = vsel %vm1481, %v1665, 0
        %1977 = vmatprep.subr.bf16.mxu0 0
        %1978 = vmatpush1.bf16.msra.mxu0 %v1101
        %1979 = vmatprep.subr.bf16.mxu0 0
        %1980 = vmatpush1.bf16.msra.mxu0 0
        %1981 = vmatprep.subr.bf16.mxu0 0
        %1982 = vmatpush1.bf16.msra.mxu0 0
        %1983 = vmatprep.subr.bf16.mxu0 0
        %1984 = vmatpush1.bf16.msra.mxu0 0
        %1985 = vmatprep.subr.bf16.mxu0 0
        %1986 = vmatpush1.bf16.msra.mxu0 0
        %1987 = vmatprep.subr.bf16.mxu0 0
        %1988 = vmatpush1.bf16.msra.mxu0 0
        %1989 = vmatprep.subr.bf16.mxu0 0
        %1990 = vmatpush1.bf16.msra.mxu0 0
        %1991 = vmatprep.subr.bf16.mxu0 0
        %1992 = vmatpush1.bf16.msra.mxu0 0
        %1993 = vmatprep.subr.bf16.mxu0 0
        %1994 = vmatpush1.bf16.msra.mxu0 0
        %1995 = vmatprep.subr.bf16.mxu0 0
        %1996 = vmatpush1.bf16.msra.mxu0 0
        %1997 = vmatprep.subr.bf16.mxu0 0
        %1998 = vmatpush1.bf16.msra.mxu0 0
        %1999 = vmatprep.subr.bf16.mxu0 0
        %2000 = vmatpush1.bf16.msra.mxu0 0
        %2001 = vmatprep.subr.bf16.mxu0 0
        %2002 = vmatpush1.bf16.msra.mxu0 0
        %2003 = vmatprep.subr.bf16.mxu0 0
        %2004 = vmatpush1.bf16.msra.mxu0 0
        %2005 = vmatprep.subr.bf16.mxu0 0
        %2006 = vmatpush1.bf16.msra.mxu0 0
        %2007 = vmatprep.subr.bf16.mxu0 0
        %2008 = vmatpush1.bf16.msra.mxu0 0
        %2009 = vmatprep.mubr.bf16.mxu0 0
        %2010 = vmatmul.mubr.bf16.gmra.mrb[0].mxu0 %v1975
        %v2011 = vpop.f32.mrb[0].mxu0
        %v2012 = vadd.f32 0.0, %v2011
        %v2013 = vpop.f32.mrb[0].mxu0
        %v2014 = vpop.f32.mrb[0].mxu0
        %v2015 = vadd.f32 0.0, %v2014
        %v2016 = vpop.f32.mrb[0].mxu0
        %2017 = vdwg.mxu0
        %v2018 = vpack.c.bf16 %v1707, %v1704
        %v2019 = vpack.c.bf16 %v1751, %v1748
        %v2020 = vpack.c.bf16 %v1795, %v1792
        %v2021 = vpack.c.bf16 %v1839, %v1836
        %v2022 = vpack.c.bf16 %v1883, %v1880
        %v2023 = vpack.c.bf16 %v1927, %v1924
        %v2024 = vpack.c.bf16 %v1971, %v1968
        %v2025 = vpack.c.bf16 %v2015, %v2012
        %2028 = vrot.lane.b32.xlu0 %v2020, 32
        %v2029 = vpop.permute.xlu0 %2028
        %2030 = vrot.lane.b32.xlu0 %v2021, 32
        %v2031 = vpop.permute.xlu0 %2030
        %2034 = vrot.lane.b32.xlu0 %v2022, 64
        %v2035 = vpop.permute.xlu0 %2034
        %2036 = vrot.lane.b32.xlu0 %v2023, 64
        %v2037 = vpop.permute.xlu0 %2036
        %2040 = vrot.lane.b32.xlu0 %v2024, 96
        %v2041 = vpop.permute.xlu0 %2040
        %2042 = vrot.lane.b32.xlu0 %v2025, 96
        %v2043 = vpop.permute.xlu0 %2042
        %v2046 = vsel %vm1104, %v2018, %v2029
        %v2049 = vsel %vm1104, %v2019, %v2031
        %vm2050 = vcmask 523264
        %v2052 = vsel %vm2050, %v2046, %v2035
        %v2054 = vsel %vm2050, %v2049, %v2037
        %vm2055 = vcmask 785408
        %v2057 = vsel %vm2055, %v2052, %v2041
        %v2060 = vsel %vm2055, %v2054, %v2043
        %v2062 = vld [vmem:[%s585] sm:$0xf]
        %v2063 = vld [vmem:[%s585 + $0x4] sm:$0xf]
        %v2064 = vld [vmem:[%s585 + $0x8] sm:$0xf]
        %v2065 = vld [vmem:[%s585 + $0xc] sm:$0xf]
        %v2066 = vld [vmem:[%s585 + $0x10] sm:$0xf]
        %v2067 = vld [vmem:[%s585 + $0x14] sm:$0xf]
        %v2068 = vld [vmem:[%s585 + $0x18] sm:$0xf]
        %v2069 = vld [vmem:[%s585 + $0x1c] sm:$0xf]
        %v2070 = vld [vmem:[%s585 + $0x20] sm:$0xf]
        %v2071 = vld [vmem:[%s585 + $0x24] sm:$0xf]
        %v2072 = vld [vmem:[%s585 + $0x28] sm:$0xf]
        %v2073 = vld [vmem:[%s585 + $0x2c] sm:$0xf]
        %v2074 = vld [vmem:[%s585 + $0x30] sm:$0xf]
        %v2075 = vld [vmem:[%s585 + $0x34] sm:$0xf]
        %v2076 = vld [vmem:[%s585 + $0x38] sm:$0xf]
        %v2077 = vld [vmem:[%s585 + $0x3c] sm:$0xf]
        %v2078 = vld [vmem:[%s683] sm:$0x1]
        %v2080 = vlaneseq
        %v2081 = vshrl.u32 %v2080, 7
        %v2082 = vsub.s32 0, %v2081
        %v2083 = vrot.slane %v2078, %v2082
        %v2101 = vunpack.c.l.b16 %v2062
        %v2102 = vunpack.c.l.b16 %v2063
        %v2103 = vunpack.c.l.b16 %v2064
        %v2104 = vunpack.c.l.b16 %v2065
        %v2105 = vunpack.c.l.b16 %v2066
        %v2106 = vunpack.c.l.b16 %v2067
        %v2107 = vunpack.c.l.b16 %v2068
        %v2108 = vunpack.c.l.b16 %v2069
        %v2109 = vunpack.c.l.b16 %v2070
        %v2110 = vunpack.c.l.b16 %v2071
        %v2111 = vunpack.c.l.b16 %v2072
        %v2112 = vunpack.c.l.b16 %v2073
        %v2113 = vunpack.c.l.b16 %v2074
        %v2114 = vunpack.c.l.b16 %v2075
        %v2115 = vunpack.c.l.b16 %v2076
        %v2116 = vunpack.c.l.b16 %v2077
        %v2117 = vpack.c.b16 %v2102, %v2101
        %v2118 = vpack.c.b16 %v2104, %v2103
        %v2119 = vpack.c.b16 %v2106, %v2105
        %v2120 = vpack.c.b16 %v2108, %v2107
        %v2121 = vpack.c.b16 %v2110, %v2109
        %v2122 = vpack.c.b16 %v2112, %v2111
        %v2123 = vpack.c.b16 %v2114, %v2113
        %v2124 = vpack.c.b16 %v2116, %v2115
        %2133 = vmatprep.subr.bf16.mxu0 0
        %2134 = vmatpush1.bf16.msra.mxu0 %v2117
        %2135 = vmatprep.subr.bf16.mxu0 0
        %2136 = vmatpush1.bf16.msra.mxu0 %v2118
        %2137 = vmatprep.subr.bf16.mxu0 0
        %2138 = vmatpush1.bf16.msra.mxu0 %v2119
        %2139 = vmatprep.subr.bf16.mxu0 0
        %2140 = vmatpush1.bf16.msra.mxu0 %v2120
        %2141 = vmatprep.subr.bf16.mxu0 0
        %2142 = vmatpush1.bf16.msra.mxu0 %v2121
        %2143 = vmatprep.subr.bf16.mxu0 0
        %2144 = vmatpush1.bf16.msra.mxu0 %v2122
        %2145 = vmatprep.subr.bf16.mxu0 0
        %2146 = vmatpush1.bf16.msra.mxu0 %v2123
        %2147 = vmatprep.subr.bf16.mxu0 0
        %2148 = vmatpush1.bf16.msra.mxu0 %v2124
        %2149 = vmatprep.subr.bf16.mxu0 0
        %2150 = vmatpush1.bf16.msra.mxu0 0
        %2151 = vmatprep.subr.bf16.mxu0 0
        %2152 = vmatpush1.bf16.msra.mxu0 0
        %2153 = vmatprep.subr.bf16.mxu0 0
        %2154 = vmatpush1.bf16.msra.mxu0 0
        %2155 = vmatprep.subr.bf16.mxu0 0
        %2156 = vmatpush1.bf16.msra.mxu0 0
        %2157 = vmatprep.subr.bf16.mxu0 0
        %2158 = vmatpush1.bf16.msra.mxu0 0
        %2159 = vmatprep.subr.bf16.mxu0 0
        %2160 = vmatpush1.bf16.msra.mxu0 0
        %2161 = vmatprep.subr.bf16.mxu0 0
        %2162 = vmatpush1.bf16.msra.mxu0 0
        %2163 = vmatprep.subr.bf16.mxu0 0
        %2164 = vmatpush1.bf16.msra.mxu0 0
        %2165 = vmatprep.mubr.bf16.mxu0 0
        %2166 = vmatmul.mubr.bf16.gmra.mrb[0].mxu0 %v2057
        %v2167 = vpop.f32.mrb[0].mxu0
        %v2168 = vadd.f32 %v2083, %v2167
        %v2169 = vpop.f32.mrb[0].mxu0
        %v2170 = vpop.f32.mrb[0].mxu0
        %v2171 = vadd.f32 %v2083, %v2170
        %v2172 = vpop.f32.mrb[0].mxu0
        %2173 = vmatprep.mubr.bf16.mxu0 0
        %2174 = vmatmul.mubr.bf16.gmra.mrb[0].mxu0 %v2060
        %v2175 = vpop.f32.mrb[0].mxu0
        %v2176 = vadd.f32 %v2083, %v2175
        %v2177 = vpop.f32.mrb[0].mxu0
        %v2178 = vpop.f32.mrb[0].mxu0
        %v2179 = vadd.f32 %v2083, %v2178
        %v2180 = vpop.f32.mrb[0].mxu0
        %2181 = vdwg.mxu0
        %v2182 = vadd.f32 %v711, %v2168
        %v2183 = vadd.f32 %v712, %v2171
        %v2184 = vadd.f32 %v713, %v2176
        %v2185 = vadd.f32 %v714, %v2179
        %v2186 = vld [vmem:[%s686] sm:$0x1]
        %v2187 = vld [vmem:[%s689] sm:$0x1]
        %2188 = vadd.xlane.f32.xlu0 %v2182
        %v2189 = vpop.xlane.xlu0 %2188
        %2190 = vadd.xlane.f32.xlu0 %v2183
        %v2191 = vpop.xlane.xlu0 %2190
        %2192 = vadd.xlane.f32.xlu0 %v2184
        %v2193 = vpop.xlane.xlu0 %2192
        %2194 = vadd.xlane.f32.xlu0 %v2185
        %v2195 = vpop.xlane.xlu0 %2194
        %v2196 = vmul.f32 %v2189, %v725
        %v2197 = vmul.f32 %v2191, %v725
        %v2198 = vmul.f32 %v2193, %v725
        %v2199 = vmul.f32 %v2195, %v725
        %v2200 = vsub.f32 %v2182, %v2196
        %v2201 = vsub.f32 %v2183, %v2197
        %v2202 = vsub.f32 %v2184, %v2198
        %v2203 = vsub.f32 %v2185, %v2199
        %v2204 = vmul.f32 %v2200, %v2200
        %v2205 = vmul.f32 %v2201, %v2201
        %v2206 = vmul.f32 %v2202, %v2202
        %v2207 = vmul.f32 %v2203, %v2203
        %2208 = vadd.xlane.f32.xlu0 %v2204
        %v2209 = vpop.xlane.xlu0 %2208
        %2210 = vadd.xlane.f32.xlu0 %v2205
        %v2211 = vpop.xlane.xlu0 %2210
        %2212 = vadd.xlane.f32.xlu0 %v2206
        %v2213 = vpop.xlane.xlu0 %2212
        %2214 = vadd.xlane.f32.xlu0 %v2207
        %v2215 = vpop.xlane.xlu0 %2214
        %v2216 = vmul.f32 %v2209, %v725
        %v2217 = vmul.f32 %v2211, %v725
        %v2218 = vmul.f32 %v2213, %v725
        %v2219 = vmul.f32 %v2215, %v725
        %v2220 = vadd.f32 %v2216, 1e-05
        %v2221 = vadd.f32 %v2217, 1e-05
        %v2222 = vadd.f32 %v2218, 1e-05
        %v2223 = vadd.f32 %v2219, 1e-05
        %v2224 = vrsqrt.pop %v2220
        %v2225 = vrsqrt.pop %v2221
        %v2226 = vrsqrt.pop %v2222
        %v2227 = vrsqrt.pop %v2223
        %v2228 = vmul.f32 %v2200, %v2224
        %v2229 = vmul.f32 %v2201, %v2225
        %v2230 = vmul.f32 %v2202, %v2226
        %v2231 = vmul.f32 %v2203, %v2227
        %v2233 = vlaneseq
        %v2234 = vshrl.u32 %v2233, 7
        %v2235 = vsub.s32 0, %v2234
        %v2236 = vrot.slane %v2186, %v2235
        %v2238 = vmul.f32 %v2228, %v2236
        %v2239 = vmul.f32 %v2229, %v2236
        %v2240 = vmul.f32 %v2230, %v2236
        %v2241 = vmul.f32 %v2231, %v2236
        %v2243 = vlaneseq
        %v2244 = vshrl.u32 %v2243, 7
        %v2245 = vsub.s32 0, %v2244
        %v2246 = vrot.slane %v2187, %v2245
        %v2248 = vadd.f32 %v2238, %v2246
        %v2249 = vadd.f32 %v2239, %v2246
        %v2250 = vadd.f32 %v2240, %v2246
        %v2251 = vadd.f32 %v2241, %v2246
        %v2252 = vpack.c.bf16 %v2249, %v2248
        %v2253 = vpack.c.bf16 %v2251, %v2250
        %v2254 = vld [vmem:[%s594] sm:$0xff]
        %v2255 = vld [vmem:[%s594 + $0x8] sm:$0xff]
        %v2256 = vld [vmem:[%s594 + $0x10] sm:$0xff]
        %v2257 = vld [vmem:[%s594 + $0x18] sm:$0xff]
        %v2258 = vld [vmem:[%s594 + $0x20] sm:$0xff]
        %v2259 = vld [vmem:[%s594 + $0x28] sm:$0xff]
        %v2260 = vld [vmem:[%s594 + $0x30] sm:$0xff]
        %v2261 = vld [vmem:[%s594 + $0x38] sm:$0xff]
        %v2262 = vld [vmem:[%s594 + $0x40] sm:$0xff]
        %v2263 = vld [vmem:[%s594 + $0x48] sm:$0xff]
        %v2264 = vld [vmem:[%s594 + $0x50] sm:$0xff]
        %v2265 = vld [vmem:[%s594 + $0x58] sm:$0xff]
        %v2266 = vld [vmem:[%s594 + $0x60] sm:$0xff]
        %v2267 = vld [vmem:[%s594 + $0x68] sm:$0xff]
        %v2268 = vld [vmem:[%s594 + $0x70] sm:$0xff]
        %v2269 = vld [vmem:[%s594 + $0x78] sm:$0xff]
        %v2270 = vld [vmem:[%s693] sm:$0x3]
        %v2272 = vlaneseq
        %v2273 = vshrl.u32 %v2272, 7
        %v2274 = vsub.s32 0, %v2273
        %v2275 = vrot.slane %v2270, %v2274
        %v2276 = vlaneseq
        %v2277 = vshrl.u32 %v2276, 7
        %v2278 = vsub.s32 1, %v2277
        %v2279 = vrot.slane %v2270, %v2278
        %v2298 = vunpack.c.l.b16 %v2254
        %v2299 = vunpack.c.h.b16 %v2254
        %v2300 = vunpack.c.l.b16 %v2255
        %v2301 = vunpack.c.h.b16 %v2255
        %v2302 = vunpack.c.l.b16 %v2256
        %v2303 = vunpack.c.h.b16 %v2256
        %v2304 = vunpack.c.l.b16 %v2257
        %v2305 = vunpack.c.h.b16 %v2257
        %v2306 = vunpack.c.l.b16 %v2258
        %v2307 = vunpack.c.h.b16 %v2258
        %v2308 = vunpack.c.l.b16 %v2259
        %v2309 = vunpack.c.h.b16 %v2259
        %v2310 = vunpack.c.l.b16 %v2260
        %v2311 = vunpack.c.h.b16 %v2260
        %v2312 = vunpack.c.l.b16 %v2261
        %v2313 = vunpack.c.h.b16 %v2261
        %v2314 = vunpack.c.l.b16 %v2262
        %v2315 = vunpack.c.h.b16 %v2262
        %v2316 = vunpack.c.l.b16 %v2263
        %v2317 = vunpack.c.h.b16 %v2263
        %v2318 = vunpack.c.l.b16 %v2264
        %v2319 = vunpack.c.h.b16 %v2264
        %v2320 = vunpack.c.l.b16 %v2265
        %v2321 = vunpack.c.h.b16 %v2265
        %v2322 = vunpack.c.l.b16 %v2266
        %v2323 = vunpack.c.h.b16 %v2266
        %v2324 = vunpack.c.l.b16 %v2267
        %v2325 = vunpack.c.h.b16 %v2267
        %v2326 = vunpack.c.l.b16 %v2268
        %v2327 = vunpack.c.h.b16 %v2268
        %v2328 = vunpack.c.l.b16 %v2269
        %v2329 = vunpack.c.h.b16 %v2269
        %v2330 = vpack.c.b16 %v2300, %v2298
        %v2331 = vpack.c.b16 %v2301, %v2299
        %v2332 = vpack.c.b16 %v2304, %v2302
        %v2333 = vpack.c.b16 %v2305, %v2303
        %v2334 = vpack.c.b16 %v2308, %v2306
        %v2335 = vpack.c.b16 %v2309, %v2307
        %v2336 = vpack.c.b16 %v2312, %v2310
        %v2337 = vpack.c.b16 %v2313, %v2311
        %v2338 = vpack.c.b16 %v2316, %v2314
        %v2339 = vpack.c.b16 %v2317, %v2315
        %v2340 = vpack.c.b16 %v2320, %v2318
        %v2341 = vpack.c.b16 %v2321, %v2319
        %v2342 = vpack.c.b16 %v2324, %v2322
        %v2343 = vpack.c.b16 %v2325, %v2323
        %v2344 = vpack.c.b16 %v2328, %v2326
        %v2345 = vpack.c.b16 %v2329, %v2327
        %2362 = vmatprep.subr.bf16.mxu0 %v2331
        %2363 = vmatpush1.bf16.msra.mxu0 %v2330
        %2364 = vmatprep.subr.bf16.mxu0 %v2333
        %2365 = vmatpush1.bf16.msra.mxu0 %v2332
        %2366 = vmatprep.subr.bf16.mxu0 %v2335
        %2367 = vmatpush1.bf16.msra.mxu0 %v2334
        %2368 = vmatprep.subr.bf16.mxu0 %v2337
        %2369 = vmatpush1.bf16.msra.mxu0 %v2336
        %2370 = vmatprep.subr.bf16.mxu0 %v2339
        %2371 = vmatpush1.bf16.msra.mxu0 %v2338
        %2372 = vmatprep.subr.bf16.mxu0 %v2341
        %2373 = vmatpush1.bf16.msra.mxu0 %v2340
        %2374 = vmatprep.subr.bf16.mxu0 %v2343
        %2375 = vmatpush1.bf16.msra.mxu0 %v2342
        %2376 = vmatprep.subr.bf16.mxu0 %v2345
        %2377 = vmatpush1.bf16.msra.mxu0 %v2344
        %2378 = vmatprep.subr.bf16.mxu0 0
        %2379 = vmatpush1.bf16.msra.mxu0 0
        %2380 = vmatprep.subr.bf16.mxu0 0
        %2381 = vmatpush1.bf16.msra.mxu0 0
        %2382 = vmatprep.subr.bf16.mxu0 0
        %2383 = vmatpush1.bf16.msra.mxu0 0
        %2384 = vmatprep.subr.bf16.mxu0 0
        %2385 = vmatpush1.bf16.msra.mxu0 0
        %2386 = vmatprep.subr.bf16.mxu0 0
        %2387 = vmatpush1.bf16.msra.mxu0 0
        %2388 = vmatprep.subr.bf16.mxu0 0
        %2389 = vmatpush1.bf16.msra.mxu0 0
        %2390 = vmatprep.subr.bf16.mxu0 0
        %2391 = vmatpush1.bf16.msra.mxu0 0
        %2392 = vmatprep.subr.bf16.mxu0 0
        %2393 = vmatpush1.bf16.msra.mxu0 0
        %2394 = vmatprep.mubr.bf16.mxu0 0
        %2395 = vmatmul.mubr.bf16.gmra.mrb[0].mxu0 %v2252
        %v2396 = vpop.f32.mrb[0].mxu0
        %v2397 = vadd.f32 %v2275, %v2396
        %v2398 = vpop.f32.mrb[0].mxu0
        %v2399 = vadd.f32 %v2279, %v2398
        %v2400 = vpop.f32.mrb[0].mxu0
        %v2401 = vadd.f32 %v2275, %v2400
        %v2402 = vpop.f32.mrb[0].mxu0
        %v2403 = vadd.f32 %v2279, %v2402
        %2404 = vmatprep.mubr.bf16.mxu0 0
        %2405 = vmatmul.mubr.bf16.gmra.mrb[0].mxu0 %v2253
        %v2406 = vpop.f32.mrb[0].mxu0
        %v2407 = vadd.f32 %v2275, %v2406
        %v2408 = vpop.f32.mrb[0].mxu0
        %v2409 = vadd.f32 %v2279, %v2408
        %v2410 = vpop.f32.mrb[0].mxu0
        %v2411 = vadd.f32 %v2275, %v2410
        %v2412 = vpop.f32.mrb[0].mxu0
        %v2413 = vadd.f32 %v2279, %v2412
        %2414 = vdwg.mxu0
        %v2415 = vmax.f32 %v2397, 0.0
        %v2416 = vmax.f32 %v2399, 0.0
        %v2417 = vmax.f32 %v2401, 0.0
        %v2418 = vmax.f32 %v2403, 0.0
        %v2419 = vmax.f32 %v2407, 0.0
        %v2420 = vmax.f32 %v2409, 0.0
        %v2421 = vmax.f32 %v2411, 0.0
        %v2422 = vmax.f32 %v2413, 0.0
        %v2423 = vpack.c.bf16 %v2417, %v2415
        %v2424 = vpack.c.bf16 %v2418, %v2416
        %v2425 = vpack.c.bf16 %v2421, %v2419
        %v2426 = vpack.c.bf16 %v2422, %v2420
        %v2427 = vld [vmem:[%s603] sm:$0xf]
        %v2428 = vld [vmem:[%s603 + $0x4] sm:$0xf]
        %v2429 = vld [vmem:[%s603 + $0x8] sm:$0xf]
        %v2430 = vld [vmem:[%s603 + $0xc] sm:$0xf]
        %v2431 = vld [vmem:[%s603 + $0x10] sm:$0xf]
        %v2432 = vld [vmem:[%s603 + $0x14] sm:$0xf]
        %v2433 = vld [vmem:[%s603 + $0x18] sm:$0xf]
        %v2434 = vld [vmem:[%s603 + $0x1c] sm:$0xf]
        %v2435 = vld [vmem:[%s603 + $0x20] sm:$0xf]
        %v2436 = vld [vmem:[%s603 + $0x24] sm:$0xf]
        %v2437 = vld [vmem:[%s603 + $0x28] sm:$0xf]
        %v2438 = vld [vmem:[%s603 + $0x2c] sm:$0xf]
        %v2439 = vld [vmem:[%s603 + $0x30] sm:$0xf]
        %v2440 = vld [vmem:[%s603 + $0x34] sm:$0xf]
        %v2441 = vld [vmem:[%s603 + $0x38] sm:$0xf]
        %v2442 = vld [vmem:[%s603 + $0x3c] sm:$0xf]
        %v2443 = vld [vmem:[%s603 + $0x40] sm:$0xf]
        %v2444 = vld [vmem:[%s603 + $0x44] sm:$0xf]
        %v2445 = vld [vmem:[%s603 + $0x48] sm:$0xf]
        %v2446 = vld [vmem:[%s603 + $0x4c] sm:$0xf]
        %v2447 = vld [vmem:[%s603 + $0x50] sm:$0xf]
        %v2448 = vld [vmem:[%s603 + $0x54] sm:$0xf]
        %v2449 = vld [vmem:[%s603 + $0x58] sm:$0xf]
        %v2450 = vld [vmem:[%s603 + $0x5c] sm:$0xf]
        %v2451 = vld [vmem:[%s603 + $0x60] sm:$0xf]
        %v2452 = vld [vmem:[%s603 + $0x64] sm:$0xf]
        %v2453 = vld [vmem:[%s603 + $0x68] sm:$0xf]
        %v2454 = vld [vmem:[%s603 + $0x6c] sm:$0xf]
        %v2455 = vld [vmem:[%s603 + $0x70] sm:$0xf]
        %v2456 = vld [vmem:[%s603 + $0x74] sm:$0xf]
        %v2457 = vld [vmem:[%s603 + $0x78] sm:$0xf]
        %v2458 = vld [vmem:[%s603 + $0x7c] sm:$0xf]
        %v2459 = vld [vmem:[%s696] sm:$0x1]
        %v2461 = vlaneseq
        %v2462 = vshrl.u32 %v2461, 7
        %v2463 = vsub.s32 0, %v2462
        %v2464 = vrot.slane %v2459, %v2463
        %v2498 = vunpack.c.l.b16 %v2427
        %v2499 = vunpack.c.l.b16 %v2428
        %v2500 = vunpack.c.l.b16 %v2429
        %v2501 = vunpack.c.l.b16 %v2430
        %v2502 = vunpack.c.l.b16 %v2431
        %v2503 = vunpack.c.l.b16 %v2432
        %v2504 = vunpack.c.l.b16 %v2433
        %v2505 = vunpack.c.l.b16 %v2434
        %v2506 = vunpack.c.l.b16 %v2435
        %v2507 = vunpack.c.l.b16 %v2436
        %v2508 = vunpack.c.l.b16 %v2437
        %v2509 = vunpack.c.l.b16 %v2438
        %v2510 = vunpack.c.l.b16 %v2439
        %v2511 = vunpack.c.l.b16 %v2440
        %v2512 = vunpack.c.l.b16 %v2441
        %v2513 = vunpack.c.l.b16 %v2442
        %v2514 = vunpack.c.l.b16 %v2443
        %v2515 = vunpack.c.l.b16 %v2444
        %v2516 = vunpack.c.l.b16 %v2445
        %v2517 = vunpack.c.l.b16 %v2446
        %v2518 = vunpack.c.l.b16 %v2447
        %v2519 = vunpack.c.l.b16 %v2448
        %v2520 = vunpack.c.l.b16 %v2449
        %v2521 = vunpack.c.l.b16 %v2450
        %v2522 = vunpack.c.l.b16 %v2451
        %v2523 = vunpack.c.l.b16 %v2452
        %v2524 = vunpack.c.l.b16 %v2453
        %v2525 = vunpack.c.l.b16 %v2454
        %v2526 = vunpack.c.l.b16 %v2455
        %v2527 = vunpack.c.l.b16 %v2456
        %v2528 = vunpack.c.l.b16 %v2457
        %v2529 = vunpack.c.l.b16 %v2458
        %v2530 = vpack.c.b16 %v2499, %v2498
        %v2531 = vpack.c.b16 %v2501, %v2500
        %v2532 = vpack.c.b16 %v2503, %v2502
        %v2533 = vpack.c.b16 %v2505, %v2504
        %v2534 = vpack.c.b16 %v2507, %v2506
        %v2535 = vpack.c.b16 %v2509, %v2508
        %v2536 = vpack.c.b16 %v2511, %v2510
        %v2537 = vpack.c.b16 %v2513, %v2512
        %v2538 = vpack.c.b16 %v2515, %v2514
        %v2539 = vpack.c.b16 %v2517, %v2516
        %v2540 = vpack.c.b16 %v2519, %v2518
        %v2541 = vpack.c.b16 %v2521, %v2520
        %v2542 = vpack.c.b16 %v2523, %v2522
        %v2543 = vpack.c.b16 %v2525, %v2524
        %v2544 = vpack.c.b16 %v2527, %v2526
        %v2545 = vpack.c.b16 %v2529, %v2528
        %2562 = vmatprep.subr.bf16.mxu0 0
        %2563 = vmatpush1.bf16.msra.mxu0 %v2530
        %2564 = vmatprep.subr.bf16.mxu0 0
        %2565 = vmatpush1.bf16.msra.mxu0 %v2531
        %2566 = vmatprep.subr.bf16.mxu0 0
        %2567 = vmatpush1.bf16.msra.mxu0 %v2532
        %2568 = vmatprep.subr.bf16.mxu0 0
        %2569 = vmatpush1.bf16.msra.mxu0 %v2533
        %2570 = vmatprep.subr.bf16.mxu0 0
        %2571 = vmatpush1.bf16.msra.mxu0 %v2534
        %2572 = vmatprep.subr.bf16.mxu0 0
        %2573 = vmatpush1.bf16.msra.mxu0 %v2535
        %2574 = vmatprep.subr.bf16.mxu0 0
        %2575 = vmatpush1.bf16.msra.mxu0 %v2536
        %2576 = vmatprep.subr.bf16.mxu0 0
        %2577 = vmatpush1.bf16.msra.mxu0 %v2537
        %2578 = vmatprep.subr.bf16.mxu0 0
        %2579 = vmatpush1.bf16.msra.mxu0 %v2538
        %2580 = vmatprep.subr.bf16.mxu0 0
        %2581 = vmatpush1.bf16.msra.mxu0 %v2539
        %2582 = vmatprep.subr.bf16.mxu0 0
        %2583 = vmatpush1.bf16.msra.mxu0 %v2540
        %2584 = vmatprep.subr.bf16.mxu0 0
        %2585 = vmatpush1.bf16.msra.mxu0 %v2541
        %2586 = vmatprep.subr.bf16.mxu0 0
        %2587 = vmatpush1.bf16.msra.mxu0 %v2542
        %2588 = vmatprep.subr.bf16.mxu0 0
        %2589 = vmatpush1.bf16.msra.mxu0 %v2543
        %2590 = vmatprep.subr.bf16.mxu0 0
        %2591 = vmatpush1.bf16.msra.mxu0 %v2544
        %2592 = vmatprep.subr.bf16.mxu0 0
        %2593 = vmatpush1.bf16.msra.mxu0 %v2545
        %2594 = vmatprep.mubr.bf16.mxu0 %v2424
        %2595 = vmatmul.mubr.bf16.gmra.mrb[0].mxu0 %v2423
        %v2596 = vpop.f32.mrb[0].mxu0
        %v2597 = vadd.f32 %v2464, %v2596
        %v2598 = vpop.f32.mrb[0].mxu0
        %v2599 = vpop.f32.mrb[0].mxu0
        %v2600 = vadd.f32 %v2464, %v2599
        %v2601 = vpop.f32.mrb[0].mxu0
        %2602 = vmatprep.mubr.bf16.mxu0 %v2426
        %2603 = vmatmul.mubr.bf16.gmra.mrb[0].mxu0 %v2425
        %v2604 = vpop.f32.mrb[0].mxu0
        %v2605 = vadd.f32 %v2464, %v2604
        %v2606 = vpop.f32.mrb[0].mxu0
        %v2607 = vpop.f32.mrb[0].mxu0
        %v2608 = vadd.f32 %v2464, %v2607
        %v2609 = vpop.f32.mrb[0].mxu0
        %2610 = vdwg.mxu0
        %v2611 = vadd.f32 %v2182, %v2597
        %v2612 = vadd.f32 %v2183, %v2600
        %v2613 = vadd.f32 %v2184, %v2605
        %v2614 = vadd.f32 %v2185, %v2608
        %2615 = vst [vmem:[#allocation2] sm:$0xff] %v2611
        %2616 = vst [vmem:[#allocation2 + $0x8] sm:$0xff] %v2612
        %2617 = vst [vmem:[#allocation2 + $0x10] sm:$0xff] %v2613
        %2618 = vst [vmem:[#allocation2 + $0x18] sm:$0xff] %v2614
        %p2619 = scmp.eq.s32.totalorder %s39, 1
        // Predicated region
        $region97: #{tpu_custom_call.1} parent=67 // pred_check
          %p2620 = pneg %p2619
        $region98: #{tpu_custom_call.1} parent=67 // pred_check_branch
          %2622 = sbr.rel (%p2620) target = $region100
        $region99: #{tpu_custom_call.1} parent=67 // pred_region
          %2623 = vst [vmem:[#allocation14] sm:$0xff] %v2611
          %2624 = vst [vmem:[#allocation14 + $0x8] sm:$0xff] %v2612
          %2625 = vst [vmem:[#allocation14 + $0x10] sm:$0xff] %v2613
          %2626 = vst [vmem:[#allocation14 + $0x18] sm:$0xff] %v2614
        $region100: #{tpu_custom_call.1} parent=67 // pred_fallthru
          _
        // Predicated region
        $region101: #{tpu_custom_call.1} parent=67 // pred_check
          %p2627 = pneg %p376
        $region102: #{tpu_custom_call.1} parent=67 // pred_check_branch
          %2629 = sbr.rel (%p2627) target = $region104
        $region103: #{tpu_custom_call.1} parent=67 // pred_region
          %s2630 = smul.u32 2, %s38
          %s2632 = ssub.s32 512, 512
          %2633 = vsyncadd [#allocation5], %s2632
          %s2634 = smul.addr %s2630, 2
          %s2635 = smul.addr %s2634, 128
          %s2636 = scalar_lea.hbm %s12, %s2635
          %s2637 = sshll.u32 [#allocation14], 4
          %s2638 = int_to_ptr.vmem [resolvable:$true] %s2637
          %2643 = dma.vmem_to_hbm [thread:$0]  %s2638, 512, %s2636, [#allocation5], 128, 128, 8
        $region104: #{tpu_custom_call.1} parent=67 // pred_fallthru
          _
        // Predicated region
        $region105: #{tpu_custom_call.1} parent=67 // pred_check
          %p2644 = pneg %p376
        $region106: #{tpu_custom_call.1} parent=67 // pred_check_branch
          %2646 = sbr.rel (%p2644) target = $region108
        $region107: #{tpu_custom_call.1} parent=67 // pred_region
          %2647 = dma.done [#allocation5], 512
        $region108: #{tpu_custom_call.1} parent=67 // pred_fallthru
          _
      $region68: #{tpu_custom_call.1} parent=5 // pred_fallthru
        _
      %p2648 = scmp.le.s32.totalorder 2, %s29
      // Predicated region
      $region109: #{tpu_custom_call.1} parent=5 // pred_check
        %p2649 = pneg %p2648
      $region110: #{tpu_custom_call.1} parent=5 // pred_check_branch
        %2651 = sbr.rel (%p2649) target = $region112
      $region111: #{tpu_custom_call.1} parent=5 // pred_region
        %s2652 = ssub.s32 %s29, 2
      $region112: #{tpu_custom_call.1} parent=5 // pred_fallthru
        _
    $region6: #{tpu_custom_call.1} parent=1 // loop_footer
      %s33 = sadd.s32 1, %s29
    $region7: #{tpu_custom_call.1} parent=1 // loop_footer_branch
      %28 = sbr.rel target = $region3
    $region8: #{tpu_custom_call.1} parent=1 // loop_exit
      _
    %2653 = vsyncpa [#allocation4], 1
    %s2654 = scalar_lea.sflag [#allocation4], 1
    %2655 = vsyncpa %s2654, 1
    %2656 = vsyncpa [#allocation7], 1
    %s2657 = scalar_lea.sflag [#allocation7], 1
    %2658 = vsyncpa %s2657, 1
    %2659 = vsyncpa [#allocation10], 1
    %s2660 = scalar_lea.sflag [#allocation10], 1
    %2661 = vsyncpa %s2660, 1
    %2662 = vsyncpa [#allocation13], 1
    %s2663 = scalar_lea.sflag [#allocation13], 1
    %2664 = vsyncpa %s2663, 1
    %2665 = vsyncpa [#allocation5], 1
    %s2666 = scalar_lea.sflag [#allocation5], 1
    %2667 = vsyncpa %s2666, 1

</llo_original>
